<compile_context>
chip_gen: v5e
topology: v5e:2x2
jax: 0.10.0
libtpu: 0.0.40
codegen_flags: <defaults>
</compile_context>

<pallas_src>
import functools

import jax
import jax.numpy as jnp
from jax.experimental import pallas as pl
from jax.experimental.pallas import tpu as pltpu

LANES = 128
_TILE_M = 512                         # row tile for the large-batch path
_SINGLE_BLOCK_BYTES = 4 * 1024 * 1024  # per-call patch-block budget (v5e-safe)


def _round_up(v, m):
    return -(-v // m) * m


# ----------------------------------------------------------------------------
# Pallas kernel: (M,K)@(K,N) bf16 -> f32 accumulate, + bias (+ReLU), store
# ----------------------------------------------------------------------------
def _matmul_bias_kernel(x_ref, w_ref, b_ref, o_ref, *, relu):
    acc = jnp.dot(x_ref[...], w_ref[...], preferred_element_type=jnp.float32)
    acc = acc + b_ref[...]
    if relu:
        acc = jnp.maximum(acc, 0.0)
    o_ref[...] = acc.astype(o_ref.dtype)


# ----------------------------------------------------------------------------
# pallas_call wrapper (shared by conv1/conv2/conv3 epilogues and the head)
# ----------------------------------------------------------------------------
def _matmul_bias_call(x, w, b, *, relu, out_dtype):
    M, K = x.shape
    Kw, N = w.shape
    assert Kw == K and b.shape == (1, N)
    kernel = functools.partial(_matmul_bias_kernel, relu=relu)
    out_itemsize = jnp.dtype(out_dtype).itemsize
    cost = pl.CostEstimate(
        flops=2 * M * K * N, transcendentals=0,
        bytes_accessed=(M * K + K * N) * 2 + N * 4 + M * N * out_itemsize)

    if M * K * 2 <= _SINGLE_BLOCK_BYTES:
        # Small problem: one block, everything resident in VMEM.
        return pl.pallas_call(
            kernel,
            out_shape=jax.ShapeDtypeStruct((M, N), out_dtype),
            grid=(1,),
            in_specs=[pl.BlockSpec((M, K), lambda i: (0, 0)),
                      pl.BlockSpec((K, N), lambda i: (0, 0)),
                      pl.BlockSpec((1, N), lambda i: (0, 0))],
            out_specs=pl.BlockSpec((M, N), lambda i: (0, 0)),
            compiler_params=pltpu.CompilerParams(
                dimension_semantics=("arbitrary",)),
            cost_estimate=cost,
        )(x, w, b)

    # Large-batch path: tile over M ("parallel" -> sharded across TensorCores on
    # v7x), weights/bias DMA'd once via constant index_map, pipelined patch stream.
    # Ragged tails are handled by Pallas block-boundary masking (no jnp.pad copy).
    grid_m = pl.cdiv(M, _TILE_M)
    return pl.pallas_call(
        kernel,
        out_shape=jax.ShapeDtypeStruct((M, N), out_dtype),
        grid=(grid_m,),
        in_specs=[pl.BlockSpec((_TILE_M, K), lambda i: (i, 0)),
                  pl.BlockSpec((K, N), lambda i: (0, 0)),
                  pl.BlockSpec((1, N), lambda i: (0, 0))],
        out_specs=pl.BlockSpec((_TILE_M, N), lambda i: (i, 0)),
        compiler_params=pltpu.CompilerParams(
            dimension_semantics=("parallel",)),
        cost_estimate=cost,
    )(x, w, b)


# ----------------------------------------------------------------------------
# im2col glue (layout only; fused by XLA under jit).  Columns ordered (kh, kw, c),
# zero-padded to k_pad columns inside the same materialization.
# ----------------------------------------------------------------------------
def _im2col(x_nhwc, k=5, s=2, k_pad=None):
    N, H, W, C = x_nhwc.shape
    OH = (H - k) // s + 1
    OW = (W - k) // s + 1
    cols = []
    for kh in range(k):
        for kw in range(k):
            cols.append(x_nhwc[:, kh:kh + s * (OH - 1) + 1:s,
                               kw:kw + s * (OW - 1) + 1:s, :])
    p = jnp.stack(cols, axis=3).reshape(N, OH, OW, k * k * C)
    if k_pad is not None and k_pad > k * k * C:
        p = jnp.pad(p, ((0, 0), (0, 0), (0, 0), (0, k_pad - k * k * C)))
    return p, OH, OW


# ----------------------------------------------------------------------------
# One-time parameter preparation (hoisted out of the forward path)
# ----------------------------------------------------------------------------
def prepare_params(params, h, w, eps=1e-5):
    def out_sz(s):
        return (s - 5) // 2 + 1

    oh3 = out_sz(out_sz(out_sz(h)))
    ow3 = out_sz(out_sz(out_sz(w)))

    prepped = {}
    for i in ("1", "2", "3"):
        cv, bn = params[f"conv{i}"], params[f"bn{i}"]
        scale = bn["gamma"] / jnp.sqrt(bn["var"] + eps)            # (Cout,)
        bias = bn["beta"] + (cv["b"] - bn["mean"]) * scale          # (Cout,)
        wm = jnp.transpose(cv["w"], (2, 3, 1, 0)) * scale           # (KH,KW,Cin,Cout)*scale
        kh, kw, cin, cout = wm.shape
        K = kh * kw * cin
        wm = wm.reshape(K, cout)
        wm = jnp.pad(wm, ((0, _round_up(K, LANES) - K), (0, 0)))    # zero K rows to 128-mult
        prepped[f"w{i}"] = wm.astype(jnp.bfloat16)                  # (Kp, Cout) real Cout
        prepped[f"b{i}"] = bias.reshape(1, -1).astype(jnp.float32)  # (1, Cout)

    # head: PyTorch flattens NCHW as (C, H, W); permute rows to (spatial, channel)
    # so the flattened conv3 activations (batch-major, channel-minor) multiply it directly.
    hw, hb = params["head"]["w"], params["head"]["b"]               # (out, lin_in), (out,)
    out_dim = hw.shape[0]
    assert out_dim <= LANES
    c3 = params["conv3"]["w"].shape[0]
    whm = hw.reshape(out_dim, c3, oh3, ow3)
    whm = jnp.transpose(whm, (2, 3, 1, 0)).reshape(oh3 * ow3 * c3, out_dim)
    whm = jnp.pad(whm, ((0, 0), (0, LANES - out_dim)))              # lane-dense head output
    prepped["wh"] = whm.astype(jnp.bfloat16)                        # (sp*c3, 128)
    prepped["bh"] = jnp.pad(hb.reshape(1, -1),
                            ((0, 0), (0, LANES - out_dim))).astype(jnp.float32)
    return prepped


# ----------------------------------------------------------------------------
# DQN forward (4 small pallas_calls; jit-compiled so the im2col glue fuses)
# ----------------------------------------------------------------------------
def dqn_forward(prepped, x_nchw, *, num_outputs):
    x = jnp.transpose(x_nchw, (0, 2, 3, 1))                         # NCHW -> NHWC
    n = x.shape[0]

    # conv1 + bn1 + relu  (K = 75 -> 128, output 16 real channels)
    p1, oh1, ow1 = _im2col(x, k_pad=prepped["w1"].shape[0])
    p1 = p1.reshape(n * oh1 * ow1, -1).astype(jnp.bfloat16)
    a1 = _matmul_bias_call(p1, prepped["w1"], prepped["b1"],
                           relu=True, out_dtype=jnp.bfloat16)       # (n*oh1*ow1, 16)

    # conv2 + bn2 + relu  (K = 400 -> 512, output 32 real channels)
    p2, oh2, ow2 = _im2col(a1.reshape(n, oh1, ow1, -1), k_pad=prepped["w2"].shape[0])
    a2 = _matmul_bias_call(p2.reshape(n * oh2 * ow2, -1),
                           prepped["w2"], prepped["b2"],
                           relu=True, out_dtype=jnp.bfloat16)       # (n*oh2*ow2, 32)

    # conv3 + bn3 + relu  (K = 800 -> 896, output 32 real channels, batch-major rows)
    p3, oh3, ow3 = _im2col(a2.reshape(n, oh2, ow2, -1), k_pad=prepped["w3"].shape[0])
    a3 = _matmul_bias_call(p3.reshape(n * oh3 * ow3, -1),
                           prepped["w3"], prepped["b3"],
                           relu=True, out_dtype=jnp.bfloat16)       # (n*sp, 32)

    # Linear head: (n*sp, 32) -> (n, sp*32) is a metadata-only reshape of a row-major
    # buffer, so the head is a single aligned matmul with K = sp*32 (no transpose,
    # no per-spatial micro-dots).
    flat = a3.reshape(n, oh3 * ow3 * a3.shape[-1])
    out = _matmul_bias_call(flat, prepped["wh"], prepped["bh"],
                            relu=False, out_dtype=jnp.float32)      # (n, 128)
    return out[:, :num_outputs]


# ----------------------------------------------------------------------------
# Deterministic parameter init (shapes from DQN.__init__)
# ----------------------------------------------------------------------------
def init_params(key, h, w, outputs):
    def conv2d_size_out(size, k=5, s=2):
        return (size - (k - 1) - 1) // s + 1

    convw = conv2d_size_out(conv2d_size_out(conv2d_size_out(w)))
    convh = conv2d_size_out(conv2d_size_out(conv2d_size_out(h)))
    lin_in = convw * convh * 32

    keys = jax.random.split(key, 11)

    def conv_init(k1, k2, cout, cin, ks):
        fan_in = cin * ks * ks
        bound = 1.0 / (fan_in ** 0.5)
        return {
            "w": jax.random.uniform(k1, (cout, cin, ks, ks), jnp.float32, -bound, bound),
            "b": jax.random.uniform(k2, (cout,), jnp.float32, -bound, bound),
        }

    def bn_init(k1, ch):
        return {
            "gamma": 1.0 + 0.1 * jax.random.normal(k1, (ch,), jnp.float32),
            "beta": 0.05 * jnp.arange(ch, dtype=jnp.float32) / ch,
            "mean": jnp.zeros((ch,), jnp.float32),
            "var": jnp.ones((ch,), jnp.float32),
        }

    bound_h = 1.0 / (lin_in ** 0.5)
    return {
        "conv1": conv_init(keys[0], keys[1], 16, 3, 5),
        "bn1": bn_init(keys[2], 16),
        "conv2": conv_init(keys[3], keys[4], 32, 16, 5),
        "bn2": bn_init(keys[5], 32),
        "conv3": conv_init(keys[6], keys[7], 32, 32, 5),
        "bn3": bn_init(keys[8], 32),
        "head": {
            "w": jax.random.uniform(keys[9], (outputs, lin_in), jnp.float32,
                                    -bound_h, bound_h),
            "b": jax.random.uniform(keys[10], (outputs,), jnp.float32,
                                    -bound_h, bound_h),
        },
    }


# ----------------------------------------------------------------------------
# Pure-JAX f32 reference (module semantics, for correctness check)
# ----------------------------------------------------------------------------
def reference_forward(params, x_nchw, eps=1e-5):
    x = x_nchw
    for i in ("1", "2", "3"):
        cv, bn = params[f"conv{i}"], params[f"bn{i}"]
        x = jax.lax.conv_general_dilated(
            x, cv["w"], (2, 2), "VALID",
            dimension_numbers=("NCHW", "OIHW", "NCHW"))
        x = x + cv["b"][None, :, None, None]
        scale = bn["gamma"] / jnp.sqrt(bn["var"] + eps)
        x = (x - bn["mean"][None, :, None, None]) * scale[None, :, None, None] \
            + bn["beta"][None, :, None, None]
        x = jnp.maximum(x, 0.0)
    flat = x.reshape(x.shape[0], -1)
    return flat @ params["head"]["w"].T + params["head"]["b"]


if __name__ == "__main__":
    B, H, W, OUT = 2, 40, 40, 4          # 40x40 -> conv chain 18 -> 7 -> 2 (lin_in=128)
    key = jax.random.PRNGKey(0)
    k_x, k_p = jax.random.split(key)
    x = jax.random.normal(k_x, (B, 3, H, W), jnp.float32)     # NCHW like PyTorch
    params = init_params(k_p, H, W, OUT)

    prepped = prepare_params(params, H, W)                    # one-time weight prep
    forward = jax.jit(dqn_forward, static_argnames=("num_outputs",))

    out = jax.block_until_ready(forward(prepped, x, num_outputs=OUT))
    ref = jax.block_until_ready(reference_forward(params, x))

    assert out.shape == (B, OUT)
    # bf16 matmul inputs / bf16 intermediate activations with f32 accumulation:
    # compare against the f32 reference at a bf16-appropriate tolerance.
    assert jnp.allclose(out, ref, rtol=2e-2, atol=2e-2), "mismatch vs JAX reference"

    print("KERNEL_OK")
</pallas_src>

<mosaic_0001>
module attributes {stable_mosaic.version = 11 : i64} {
  func.func @_matmul_bias_kernel(%arg0: i32, %arg1: memref<648x128xbf16, #tpu.memory_space<vmem>>, %arg2: memref<128x16xbf16, #tpu.memory_space<vmem>>, %arg3: memref<1x16xf32, #tpu.memory_space<vmem>>, %arg4: memref<648x16xbf16, #tpu.memory_space<vmem>>) attributes {dimension_semantics = [#tpu.dimension_semantics<arbitrary>], iteration_bounds = array<i64: 1>, scalar_prefetch = 0 : i64, scratch_operands = 0 : i64, tpu.core_type = #tpu.core_type<tc>, window_params = [{pipeline_mode = #tpu.pipeline_mode<synchronous>, transform_indices = @transform_0, window_bounds = array<i64: 648, 128>}, {pipeline_mode = #tpu.pipeline_mode<synchronous>, transform_indices = @transform_1, window_bounds = array<i64: 128, 16>}, {pipeline_mode = #tpu.pipeline_mode<synchronous>, transform_indices = @transform_2, window_bounds = array<i64: 1, 16>}, {pipeline_mode = #tpu.pipeline_mode<synchronous>, transform_indices = @transform_3, window_bounds = array<i64: 648, 16>}]} {
    %c0 = arith.constant 0 : index
    %c0_0 = arith.constant 0 : index
    %0 = vector.load %arg1[%c0, %c0_0] : memref<648x128xbf16, #tpu.memory_space<vmem>>, vector<648x128xbf16>
    %c0_1 = arith.constant 0 : index
    %c0_2 = arith.constant 0 : index
    %1 = vector.load %arg2[%c0_1, %c0_2] : memref<128x16xbf16, #tpu.memory_space<vmem>>, vector<128x16xbf16>
    %cst = arith.constant dense<0.000000e+00> : vector<648x16xf32>
    %2 = tpu.matmul %0, %1, %cst {dimension_numbers = #tpu.dot_dimension_numbers<[1], [0], [0], [1], [0, 0, 1, 1], [], []>} : vector<648x128xbf16>, vector<128x16xbf16>, vector<648x16xf32> -> vector<648x16xf32>
    %c0_3 = arith.constant 0 : index
    %c0_4 = arith.constant 0 : index
    %3 = vector.load %arg3[%c0_3, %c0_4] : memref<1x16xf32, #tpu.memory_space<vmem>>, vector<1x16xf32>
    %4 = vector.broadcast %3 : vector<1x16xf32> to vector<648x16xf32>
    %5 = arith.addf %2, %4 : vector<648x16xf32>
    %cst_5 = arith.constant 0.000000e+00 : f32
    %6 = vector.broadcast %cst_5 : f32 to vector<648x16xf32>
    %7 = arith.maximumf %5, %6 : vector<648x16xf32>
    %8 = arith.truncf %7 : vector<648x16xf32> to vector<648x16xbf16>
    %c0_6 = arith.constant 0 : index
    %c0_7 = arith.constant 0 : index
    %9 = vector.load %arg4[%c0_6, %c0_7] : memref<648x16xbf16, #tpu.memory_space<vmem>>, vector<648x16xbf16>
    tpu.vector_store %arg4[%c0_6, %c0_7], %8 {strides = array<i32>} : memref<648x16xbf16, #tpu.memory_space<vmem>>, vector<648x16xbf16>,
    return
  }
  func.func @transform_0(%arg0: i32) -> (i32, i32) {
    %c0_i32 = arith.constant 0 : i32
    %c0_i32_0 = arith.constant 0 : i32
    %c0_i32_1 = arith.constant 0 : i32
    return %c0_i32, %c0_i32_0 : i32, i32
  }
  func.func @transform_1(%arg0: i32) -> (i32, i32) {
    %c0_i32 = arith.constant 0 : i32
    %c0_i32_0 = arith.constant 0 : i32
    %c0_i32_1 = arith.constant 0 : i32
    return %c0_i32, %c0_i32_0 : i32, i32
  }
  func.func @transform_2(%arg0: i32) -> (i32, i32) {
    %c0_i32 = arith.constant 0 : i32
    %c0_i32_0 = arith.constant 0 : i32
    %c0_i32_1 = arith.constant 0 : i32
    return %c0_i32, %c0_i32_0 : i32, i32
  }
  func.func @transform_3(%arg0: i32) -> (i32, i32) {
    %c0_i32 = arith.constant 0 : i32
    %c0_i32_0 = arith.constant 0 : i32
    %c0_i32_1 = arith.constant 0 : i32
    return %c0_i32, %c0_i32_0 : i32, i32
  }
}

module attributes {stable_mosaic.version = 11 : i64} {
  func.func @_matmul_bias_kernel(%arg0: i32, %arg1: memref<98x512xbf16, #tpu.memory_space<vmem>>, %arg2: memref<512x32xbf16, #tpu.memory_space<vmem>>, %arg3: memref<1x32xf32, #tpu.memory_space<vmem>>, %arg4: memref<98x32xbf16, #tpu.memory_space<vmem>>) attributes {dimension_semantics = [#tpu.dimension_semantics<arbitrary>], iteration_bounds = array<i64: 1>, scalar_prefetch = 0 : i64, scratch_operands = 0 : i64, tpu.core_type = #tpu.core_type<tc>, window_params = [{pipeline_mode = #tpu.pipeline_mode<synchronous>, transform_indices = @transform_0, window_bounds = array<i64: 98, 512>}, {pipeline_mode = #tpu.pipeline_mode<synchronous>, transform_indices = @transform_1, window_bounds = array<i64: 512, 32>}, {pipeline_mode = #tpu.pipeline_mode<synchronous>, transform_indices = @transform_2, window_bounds = array<i64: 1, 32>}, {pipeline_mode = #tpu.pipeline_mode<synchronous>, transform_indices = @transform_3, window_bounds = array<i64: 98, 32>}]} {
    %c0 = arith.constant 0 : index
    %c0_0 = arith.constant 0 : index
    %0 = vector.load %arg1[%c0, %c0_0] : memref<98x512xbf16, #tpu.memory_space<vmem>>, vector<98x512xbf16>
    %c0_1 = arith.constant 0 : index
    %c0_2 = arith.constant 0 : index
    %1 = vector.load %arg2[%c0_1, %c0_2] : memref<512x32xbf16, #tpu.memory_space<vmem>>, vector<512x32xbf16>
    %cst = arith.constant dense<0.000000e+00> : vector<98x32xf32>
    %2 = tpu.matmul %0, %1, %cst {dimension_numbers = #tpu.dot_dimension_numbers<[1], [0], [0], [1], [0, 0, 1, 1], [], []>} : vector<98x512xbf16>, vector<512x32xbf16>, vector<98x32xf32> -> vector<98x32xf32>
    %c0_3 = arith.constant 0 : index
    %c0_4 = arith.constant 0 : index
    %3 = vector.load %arg3[%c0_3, %c0_4] : memref<1x32xf32, #tpu.memory_space<vmem>>, vector<1x32xf32>
    %4 = vector.broadcast %3 : vector<1x32xf32> to vector<98x32xf32>
    %5 = arith.addf %2, %4 : vector<98x32xf32>
    %cst_5 = arith.constant 0.000000e+00 : f32
    %6 = vector.broadcast %cst_5 : f32 to vector<98x32xf32>
    %7 = arith.maximumf %5, %6 : vector<98x32xf32>
    %8 = arith.truncf %7 : vector<98x32xf32> to vector<98x32xbf16>
    %c0_6 = arith.constant 0 : index
    %c0_7 = arith.constant 0 : index
    %9 = vector.load %arg4[%c0_6, %c0_7] : memref<98x32xbf16, #tpu.memory_space<vmem>>, vector<98x32xbf16>
    tpu.vector_store %arg4[%c0_6, %c0_7], %8 {strides = array<i32>} : memref<98x32xbf16, #tpu.memory_space<vmem>>, vector<98x32xbf16>,
    return
  }
  func.func @transform_0(%arg0: i32) -> (i32, i32) {
    %c0_i32 = arith.constant 0 : i32
    %c0_i32_0 = arith.constant 0 : i32
    %c0_i32_1 = arith.constant 0 : i32
    return %c0_i32, %c0_i32_0 : i32, i32
  }
  func.func @transform_1(%arg0: i32) -> (i32, i32) {
    %c0_i32 = arith.constant 0 : i32
    %c0_i32_0 = arith.constant 0 : i32
    %c0_i32_1 = arith.constant 0 : i32
    return %c0_i32, %c0_i32_0 : i32, i32
  }
  func.func @transform_2(%arg0: i32) -> (i32, i32) {
    %c0_i32 = arith.constant 0 : i32
    %c0_i32_0 = arith.constant 0 : i32
    %c0_i32_1 = arith.constant 0 : i32
    return %c0_i32, %c0_i32_0 : i32, i32
  }
  func.func @transform_3(%arg0: i32) -> (i32, i32) {
    %c0_i32 = arith.constant 0 : i32
    %c0_i32_0 = arith.constant 0 : i32
    %c0_i32_1 = arith.constant 0 : i32
    return %c0_i32, %c0_i32_0 : i32, i32
  }
}

module attributes {stable_mosaic.version = 11 : i64} {
  func.func @_matmul_bias_kernel(%arg0: i32, %arg1: memref<8x896xbf16, #tpu.memory_space<vmem>>, %arg2: memref<896x32xbf16, #tpu.memory_space<vmem>>, %arg3: memref<1x32xf32, #tpu.memory_space<vmem>>, %arg4: memref<8x32xbf16, #tpu.memory_space<vmem>>) attributes {dimension_semantics = [#tpu.dimension_semantics<arbitrary>], iteration_bounds = array<i64: 1>, scalar_prefetch = 0 : i64, scratch_operands = 0 : i64, tpu.core_type = #tpu.core_type<tc>, window_params = [{pipeline_mode = #tpu.pipeline_mode<synchronous>, transform_indices = @transform_0, window_bounds = array<i64: 8, 896>}, {pipeline_mode = #tpu.pipeline_mode<synchronous>, transform_indices = @transform_1, window_bounds = array<i64: 896, 32>}, {pipeline_mode = #tpu.pipeline_mode<synchronous>, transform_indices = @transform_2, window_bounds = array<i64: 1, 32>}, {pipeline_mode = #tpu.pipeline_mode<synchronous>, transform_indices = @transform_3, window_bounds = array<i64: 8, 32>}]} {
    %c0 = arith.constant 0 : index
    %c0_0 = arith.constant 0 : index
    %0 = vector.load %arg1[%c0, %c0_0] : memref<8x896xbf16, #tpu.memory_space<vmem>>, vector<8x896xbf16>
    %c0_1 = arith.constant 0 : index
    %c0_2 = arith.constant 0 : index
    %1 = vector.load %arg2[%c0_1, %c0_2] : memref<896x32xbf16, #tpu.memory_space<vmem>>, vector<896x32xbf16>
    %cst = arith.constant dense<0.000000e+00> : vector<8x32xf32>
    %2 = tpu.matmul %0, %1, %cst {dimension_numbers = #tpu.dot_dimension_numbers<[1], [0], [0], [1], [0, 0, 1, 1], [], []>} : vector<8x896xbf16>, vector<896x32xbf16>, vector<8x32xf32> -> vector<8x32xf32>
    %c0_3 = arith.constant 0 : index
    %c0_4 = arith.constant 0 : index
    %3 = vector.load %arg3[%c0_3, %c0_4] : memref<1x32xf32, #tpu.memory_space<vmem>>, vector<1x32xf32>
    %4 = vector.broadcast %3 : vector<1x32xf32> to vector<8x32xf32>
    %5 = arith.addf %2, %4 : vector<8x32xf32>
    %cst_5 = arith.constant 0.000000e+00 : f32
    %6 = vector.broadcast %cst_5 : f32 to vector<8x32xf32>
    %7 = arith.maximumf %5, %6 : vector<8x32xf32>
    %8 = arith.truncf %7 : vector<8x32xf32> to vector<8x32xbf16>
    %c0_6 = arith.constant 0 : index
    %c0_7 = arith.constant 0 : index
    %9 = vector.load %arg4[%c0_6, %c0_7] : memref<8x32xbf16, #tpu.memory_space<vmem>>, vector<8x32xbf16>
    tpu.vector_store %arg4[%c0_6, %c0_7], %8 {strides = array<i32>} : memref<8x32xbf16, #tpu.memory_space<vmem>>, vector<8x32xbf16>,
    return
  }
  func.func @transform_0(%arg0: i32) -> (i32, i32) {
    %c0_i32 = arith.constant 0 : i32
    %c0_i32_0 = arith.constant 0 : i32
    %c0_i32_1 = arith.constant 0 : i32
    return %c0_i32, %c0_i32_0 : i32, i32
  }
  func.func @transform_1(%arg0: i32) -> (i32, i32) {
    %c0_i32 = arith.constant 0 : i32
    %c0_i32_0 = arith.constant 0 : i32
    %c0_i32_1 = arith.constant 0 : i32
    return %c0_i32, %c0_i32_0 : i32, i32
  }
  func.func @transform_2(%arg0: i32) -> (i32, i32) {
    %c0_i32 = arith.constant 0 : i32
    %c0_i32_0 = arith.constant 0 : i32
    %c0_i32_1 = arith.constant 0 : i32
    return %c0_i32, %c0_i32_0 : i32, i32
  }
  func.func @transform_3(%arg0: i32) -> (i32, i32) {
    %c0_i32 = arith.constant 0 : i32
    %c0_i32_0 = arith.constant 0 : i32
    %c0_i32_1 = arith.constant 0 : i32
    return %c0_i32, %c0_i32_0 : i32, i32
  }
}

module attributes {stable_mosaic.version = 11 : i64} {
  func.func @_matmul_bias_kernel(%arg0: i32, %arg1: memref<2x128xbf16, #tpu.memory_space<vmem>>, %arg2: memref<128x128xbf16, #tpu.memory_space<vmem>>, %arg3: memref<1x128xf32, #tpu.memory_space<vmem>>, %arg4: memref<2x128xf32, #tpu.memory_space<vmem>>) attributes {dimension_semantics = [#tpu.dimension_semantics<arbitrary>], iteration_bounds = array<i64: 1>, scalar_prefetch = 0 : i64, scratch_operands = 0 : i64, tpu.core_type = #tpu.core_type<tc>, window_params = [{pipeline_mode = #tpu.pipeline_mode<synchronous>, transform_indices = @transform_0, window_bounds = array<i64: 2, 128>}, {pipeline_mode = #tpu.pipeline_mode<synchronous>, transform_indices = @transform_1, window_bounds = array<i64: 128, 128>}, {pipeline_mode = #tpu.pipeline_mode<synchronous>, transform_indices = @transform_2, window_bounds = array<i64: 1, 128>}, {pipeline_mode = #tpu.pipeline_mode<synchronous>, transform_indices = @transform_3, window_bounds = array<i64: 2, 128>}]} {
    %c0 = arith.constant 0 : index
    %c0_0 = arith.constant 0 : index
    %0 = vector.load %arg1[%c0, %c0_0] : memref<2x128xbf16, #tpu.memory_space<vmem>>, vector<2x128xbf16>
    %c0_1 = arith.constant 0 : index
    %c0_2 = arith.constant 0 : index
    %1 = vector.load %arg2[%c0_1, %c0_2] : memref<128x128xbf16, #tpu.memory_space<vmem>>, vector<128x128xbf16>
    %cst = arith.constant dense<0.000000e+00> : vector<2x128xf32>
    %2 = tpu.matmul %0, %1, %cst {dimension_numbers = #tpu.dot_dimension_numbers<[1], [0], [0], [1], [0, 0, 1, 1], [], []>} : vector<2x128xbf16>, vector<128x128xbf16>, vector<2x128xf32> -> vector<2x128xf32>
    %c0_3 = arith.constant 0 : index
    %c0_4 = arith.constant 0 : index
    %3 = vector.load %arg3[%c0_3, %c0_4] : memref<1x128xf32, #tpu.memory_space<vmem>>, vector<1x128xf32>
    %4 = vector.broadcast %3 : vector<1x128xf32> to vector<2x128xf32>
    %5 = arith.addf %2, %4 : vector<2x128xf32>
    %c0_5 = arith.constant 0 : index
    %c0_6 = arith.constant 0 : index
    %6 = vector.load %arg4[%c0_5, %c0_6] : memref<2x128xf32, #tpu.memory_space<vmem>>, vector<2x128xf32>
    tpu.vector_store %arg4[%c0_5, %c0_6], %5 {strides = array<i32>} : memref<2x128xf32, #tpu.memory_space<vmem>>, vector<2x128xf32>,
    return
  }
  func.func @transform_0(%arg0: i32) -> (i32, i32) {
    %c0_i32 = arith.constant 0 : i32
    %c0_i32_0 = arith.constant 0 : i32
    %c0_i32_1 = arith.constant 0 : i32
    return %c0_i32, %c0_i32_0 : i32, i32
  }
  func.func @transform_1(%arg0: i32) -> (i32, i32) {
    %c0_i32 = arith.constant 0 : i32
    %c0_i32_0 = arith.constant 0 : i32
    %c0_i32_1 = arith.constant 0 : i32
    return %c0_i32, %c0_i32_0 : i32, i32
  }
  func.func @transform_2(%arg0: i32) -> (i32, i32) {
    %c0_i32 = arith.constant 0 : i32
    %c0_i32_0 = arith.constant 0 : i32
    %c0_i32_1 = arith.constant 0 : i32
    return %c0_i32, %c0_i32_0 : i32, i32
  }
  func.func @transform_3(%arg0: i32) -> (i32, i32) {
    %c0_i32 = arith.constant 0 : i32
    %c0_i32_0 = arith.constant 0 : i32
    %c0_i32_1 = arith.constant 0 : i32
    return %c0_i32, %c0_i32_0 : i32, i32
  }
}

</mosaic_0001>

<llo_original>
// kernel: dqn_forward.4
$region0: #{dqn_forward.4}
  #allocation0 [shape = 'u32[]', space=smem, size = 0x4, offset = 0x4, fixed_abs, tag = 'smem constant byte address 0x4 - core index']
  #allocation1 [shape = 'u32[72,128]{1,0:T(1,128)}', space=vmem, size = 0x9000, scoped, tag = 'internal scratch']
  %s0 = inlined_call_operand.vmem [shape: bf16[648,128], index: 0, kind: input, shape index: {}]
  %s1 = inlined_call_operand.vmem [shape: bf16[128,16], index: 1, kind: input, shape index: {}]
  %s2 = inlined_call_operand.vmem [shape: f32[1,16], index: 2, kind: input, shape index: {}]
  %s3 = inlined_call_operand.vmem [shape: bf16[648,16], index: 3, kind: output, shape index: {}]
  %s4 = sld [smem:[#allocation0]]
  $region22: #{dqn_forward.4} parent=0
    _
  %s6 = ssub.s32 1, %s4
  %s7 = scalar_select 0, %s6, %s4
  // Predicated region
  $region2: #{dqn_forward.4} parent=0 // pred_check
    _
  $region3: #{dqn_forward.4} parent=0 // pred_check_branch
    %9 = sbr.rel (0) target = $region5
  $region4: #{dqn_forward.4} parent=0 // pred_region
    _
  $region5: #{dqn_forward.4} parent=0 // pred_fallthru
    _
  // Predicated region
  $region6: #{dqn_forward.4} parent=0 // pred_check
    _
  $region7: #{dqn_forward.4} parent=0 // pred_check_branch
    %11 = sbr.rel (0) target = $region9
  $region8: #{dqn_forward.4} parent=0 // pred_region
    _
  $region9: #{dqn_forward.4} parent=0 // pred_fallthru
    _
  // Predicated region
  $region10: #{dqn_forward.4} parent=0 // pred_check
    _
  $region11: #{dqn_forward.4} parent=0 // pred_check_branch
    %13 = sbr.rel (0) target = $region13
  $region12: #{dqn_forward.4} parent=0 // pred_region
    _
  $region13: #{dqn_forward.4} parent=0 // pred_fallthru
    _
  %v14 = vld [vmem:[%s0] sm:$0xf]
  %v15 = vld [vmem:[%s0 + $0x4] sm:$0xf]
  %v16 = vld [vmem:[%s0 + $0x8] sm:$0xf]
  %v17 = vld [vmem:[%s0 + $0xc] sm:$0xf]
  %v18 = vld [vmem:[%s0 + $0x10] sm:$0xf]
  %v19 = vld [vmem:[%s0 + $0x14] sm:$0xf]
  %v20 = vld [vmem:[%s0 + $0x18] sm:$0xf]
  %v21 = vld [vmem:[%s0 + $0x1c] sm:$0xf]
  %v22 = vld [vmem:[%s0 + $0x20] sm:$0xf]
  %v23 = vld [vmem:[%s0 + $0x24] sm:$0xf]
  %v24 = vld [vmem:[%s0 + $0x28] sm:$0xf]
  %v25 = vld [vmem:[%s0 + $0x2c] sm:$0xf]
  %v26 = vld [vmem:[%s0 + $0x30] sm:$0xf]
  %v27 = vld [vmem:[%s0 + $0x34] sm:$0xf]
  %v28 = vld [vmem:[%s0 + $0x38] sm:$0xf]
  %v29 = vld [vmem:[%s0 + $0x3c] sm:$0xf]
  %v30 = vld [vmem:[%s0 + $0x40] sm:$0xf]
  %v31 = vld [vmem:[%s0 + $0x44] sm:$0xf]
  %v32 = vld [vmem:[%s0 + $0x48] sm:$0xf]
  %v33 = vld [vmem:[%s0 + $0x4c] sm:$0xf]
  %v34 = vld [vmem:[%s0 + $0x50] sm:$0xf]
  %v35 = vld [vmem:[%s0 + $0x54] sm:$0xf]
  %v36 = vld [vmem:[%s0 + $0x58] sm:$0xf]
  %v37 = vld [vmem:[%s0 + $0x5c] sm:$0xf]
  %v38 = vld [vmem:[%s0 + $0x60] sm:$0xf]
  %v39 = vld [vmem:[%s0 + $0x64] sm:$0xf]
  %v40 = vld [vmem:[%s0 + $0x68] sm:$0xf]
  %v41 = vld [vmem:[%s0 + $0x6c] sm:$0xf]
  %v42 = vld [vmem:[%s0 + $0x70] sm:$0xf]
  %v43 = vld [vmem:[%s0 + $0x74] sm:$0xf]
  %v44 = vld [vmem:[%s0 + $0x78] sm:$0xf]
  %v45 = vld [vmem:[%s0 + $0x7c] sm:$0xf]
  %v46 = vld [vmem:[%s0 + $0x80] sm:$0xf]
  %v47 = vld [vmem:[%s0 + $0x84] sm:$0xf]
  %v48 = vld [vmem:[%s0 + $0x88] sm:$0xf]
  %v49 = vld [vmem:[%s0 + $0x8c] sm:$0xf]
  %v50 = vld [vmem:[%s0 + $0x90] sm:$0xf]
  %v51 = vld [vmem:[%s0 + $0x94] sm:$0xf]
  %v52 = vld [vmem:[%s0 + $0x98] sm:$0xf]
  %v53 = vld [vmem:[%s0 + $0x9c] sm:$0xf]
  %v54 = vld [vmem:[%s0 + $0xa0] sm:$0xf]
  %v55 = vld [vmem:[%s0 + $0xa4] sm:$0xf]
  %v56 = vld [vmem:[%s0 + $0xa8] sm:$0xf]
  %v57 = vld [vmem:[%s0 + $0xac] sm:$0xf]
  %v58 = vld [vmem:[%s0 + $0xb0] sm:$0xf]
  %v59 = vld [vmem:[%s0 + $0xb4] sm:$0xf]
  %v60 = vld [vmem:[%s0 + $0xb8] sm:$0xf]
  %v61 = vld [vmem:[%s0 + $0xbc] sm:$0xf]
  %v62 = vld [vmem:[%s0 + $0xc0] sm:$0xf]
  %v63 = vld [vmem:[%s0 + $0xc4] sm:$0xf]
  %v64 = vld [vmem:[%s0 + $0xc8] sm:$0xf]
  %v65 = vld [vmem:[%s0 + $0xcc] sm:$0xf]
  %v66 = vld [vmem:[%s0 + $0xd0] sm:$0xf]
  %v67 = vld [vmem:[%s0 + $0xd4] sm:$0xf]
  %v68 = vld [vmem:[%s0 + $0xd8] sm:$0xf]
  %v69 = vld [vmem:[%s0 + $0xdc] sm:$0xf]
  %v70 = vld [vmem:[%s0 + $0xe0] sm:$0xf]
  %v71 = vld [vmem:[%s0 + $0xe4] sm:$0xf]
  %v72 = vld [vmem:[%s0 + $0xe8] sm:$0xf]
  %v73 = vld [vmem:[%s0 + $0xec] sm:$0xf]
  %v74 = vld [vmem:[%s0 + $0xf0] sm:$0xf]
  %v75 = vld [vmem:[%s0 + $0xf4] sm:$0xf]
  %v76 = vld [vmem:[%s0 + $0xf8] sm:$0xf]
  %v77 = vld [vmem:[%s0 + $0xfc] sm:$0xf]
  %v78 = vld [vmem:[%s0 + $0x100] sm:$0xf]
  %v79 = vld [vmem:[%s0 + $0x104] sm:$0xf]
  %v80 = vld [vmem:[%s0 + $0x108] sm:$0xf]
  %v81 = vld [vmem:[%s0 + $0x10c] sm:$0xf]
  %v82 = vld [vmem:[%s0 + $0x110] sm:$0xf]
  %v83 = vld [vmem:[%s0 + $0x114] sm:$0xf]
  %v84 = vld [vmem:[%s0 + $0x118] sm:$0xf]
  %v85 = vld [vmem:[%s0 + $0x11c] sm:$0xf]
  %v86 = vld [vmem:[%s0 + $0x120] sm:$0xf]
  %v87 = vld [vmem:[%s0 + $0x124] sm:$0xf]
  %v88 = vld [vmem:[%s0 + $0x128] sm:$0xf]
  %v89 = vld [vmem:[%s0 + $0x12c] sm:$0xf]
  %v90 = vld [vmem:[%s0 + $0x130] sm:$0xf]
  %v91 = vld [vmem:[%s0 + $0x134] sm:$0xf]
  %v92 = vld [vmem:[%s0 + $0x138] sm:$0xf]
  %v93 = vld [vmem:[%s0 + $0x13c] sm:$0xf]
  %v94 = vld [vmem:[%s0 + $0x140] sm:$0xf]
  %v95 = vld [vmem:[%s1] sm:$0xf]
  %v96 = vld [vmem:[%s1 + $0x4] sm:$0xf]
  %v97 = vld [vmem:[%s1 + $0x8] sm:$0xf]
  %v98 = vld [vmem:[%s1 + $0xc] sm:$0xf]
  %v99 = vld [vmem:[%s1 + $0x10] sm:$0xf]
  %v100 = vld [vmem:[%s1 + $0x14] sm:$0xf]
  %v101 = vld [vmem:[%s1 + $0x18] sm:$0xf]
  %v102 = vld [vmem:[%s1 + $0x1c] sm:$0xf]
  %v103 = vld [vmem:[%s1 + $0x20] sm:$0xf]
  %v104 = vld [vmem:[%s1 + $0x24] sm:$0xf]
  %v105 = vld [vmem:[%s1 + $0x28] sm:$0xf]
  %v106 = vld [vmem:[%s1 + $0x2c] sm:$0xf]
  %v107 = vld [vmem:[%s1 + $0x30] sm:$0xf]
  %v108 = vld [vmem:[%s1 + $0x34] sm:$0xf]
  %v109 = vld [vmem:[%s1 + $0x38] sm:$0xf]
  %v110 = vld [vmem:[%s1 + $0x3c] sm:$0xf]
  %v111 = vld [vmem:[%s2] sm:$0x1]
  %v113 = vperm.slane %v111, 0
  %v196 = vunpack.c.l.b16 %v14
  %v197 = vunpack.c.l.b16 %v15
  %v198 = vunpack.c.l.b16 %v16
  %v199 = vunpack.c.l.b16 %v17
  %v200 = vunpack.c.l.b16 %v18
  %v201 = vunpack.c.l.b16 %v19
  %v202 = vunpack.c.l.b16 %v20
  %v203 = vunpack.c.l.b16 %v21
  %v204 = vunpack.c.l.b16 %v22
  %v205 = vunpack.c.l.b16 %v23
  %v206 = vunpack.c.l.b16 %v24
  %v207 = vunpack.c.l.b16 %v25
  %v208 = vunpack.c.l.b16 %v26
  %v209 = vunpack.c.l.b16 %v27
  %v210 = vunpack.c.l.b16 %v28
  %v211 = vunpack.c.l.b16 %v29
  %v212 = vunpack.c.l.b16 %v30
  %v213 = vunpack.c.l.b16 %v31
  %v214 = vunpack.c.l.b16 %v32
  %v215 = vunpack.c.l.b16 %v33
  %v216 = vunpack.c.l.b16 %v34
  %v217 = vunpack.c.l.b16 %v35
  %v218 = vunpack.c.l.b16 %v36
  %v219 = vunpack.c.l.b16 %v37
  %v220 = vunpack.c.l.b16 %v38
  %v221 = vunpack.c.l.b16 %v39
  %v222 = vunpack.c.l.b16 %v40
  %v223 = vunpack.c.l.b16 %v41
  %v224 = vunpack.c.l.b16 %v42
  %v225 = vunpack.c.l.b16 %v43
  %v226 = vunpack.c.l.b16 %v44
  %v227 = vunpack.c.l.b16 %v45
  %v228 = vunpack.c.l.b16 %v46
  %v229 = vunpack.c.l.b16 %v47
  %v230 = vunpack.c.l.b16 %v48
  %v231 = vunpack.c.l.b16 %v49
  %v232 = vunpack.c.l.b16 %v50
  %v233 = vunpack.c.l.b16 %v51
  %v234 = vunpack.c.l.b16 %v52
  %v235 = vunpack.c.l.b16 %v53
  %v236 = vunpack.c.l.b16 %v54
  %v237 = vunpack.c.l.b16 %v55
  %v238 = vunpack.c.l.b16 %v56
  %v239 = vunpack.c.l.b16 %v57
  %v240 = vunpack.c.l.b16 %v58
  %v241 = vunpack.c.l.b16 %v59
  %v242 = vunpack.c.l.b16 %v60
  %v243 = vunpack.c.l.b16 %v61
  %v244 = vunpack.c.l.b16 %v62
  %v245 = vunpack.c.l.b16 %v63
  %v246 = vunpack.c.l.b16 %v64
  %v247 = vunpack.c.l.b16 %v65
  %v248 = vunpack.c.l.b16 %v66
  %v249 = vunpack.c.l.b16 %v67
  %v250 = vunpack.c.l.b16 %v68
  %v251 = vunpack.c.l.b16 %v69
  %v252 = vunpack.c.l.b16 %v70
  %v253 = vunpack.c.l.b16 %v71
  %v254 = vunpack.c.l.b16 %v72
  %v255 = vunpack.c.l.b16 %v73
  %v256 = vunpack.c.l.b16 %v74
  %v257 = vunpack.c.l.b16 %v75
  %v258 = vunpack.c.l.b16 %v76
  %v259 = vunpack.c.l.b16 %v77
  %v260 = vunpack.c.l.b16 %v78
  %v261 = vunpack.c.l.b16 %v79
  %v262 = vunpack.c.l.b16 %v80
  %v263 = vunpack.c.l.b16 %v81
  %v264 = vunpack.c.l.b16 %v82
  %v265 = vunpack.c.l.b16 %v83
  %v266 = vunpack.c.l.b16 %v84
  %v267 = vunpack.c.l.b16 %v85
  %v268 = vunpack.c.l.b16 %v86
  %v269 = vunpack.c.l.b16 %v87
  %v270 = vunpack.c.l.b16 %v88
  %v271 = vunpack.c.l.b16 %v89
  %v272 = vunpack.c.l.b16 %v90
  %v273 = vunpack.c.l.b16 %v91
  %v274 = vunpack.c.l.b16 %v92
  %v275 = vunpack.c.l.b16 %v93
  %v276 = vunpack.c.l.b16 %v94
  %v277 = vpack.c.b16 %v197, %v196
  %v278 = vpack.c.b16 %v199, %v198
  %v279 = vpack.c.b16 %v201, %v200
  %v280 = vpack.c.b16 %v203, %v202
  %v281 = vpack.c.b16 %v205, %v204
  %v282 = vpack.c.b16 %v207, %v206
  %v283 = vpack.c.b16 %v209, %v208
  %v284 = vpack.c.b16 %v211, %v210
  %v285 = vpack.c.b16 %v213, %v212
  %v286 = vpack.c.b16 %v215, %v214
  %v287 = vpack.c.b16 %v217, %v216
  %v288 = vpack.c.b16 %v219, %v218
  %v289 = vpack.c.b16 %v221, %v220
  %v290 = vpack.c.b16 %v223, %v222
  %v291 = vpack.c.b16 %v225, %v224
  %v292 = vpack.c.b16 %v227, %v226
  %v293 = vpack.c.b16 %v229, %v228
  %v294 = vpack.c.b16 %v231, %v230
  %v295 = vpack.c.b16 %v233, %v232
  %v296 = vpack.c.b16 %v235, %v234
  %v297 = vpack.c.b16 %v237, %v236
  %v298 = vpack.c.b16 %v239, %v238
  %v299 = vpack.c.b16 %v241, %v240
  %v300 = vpack.c.b16 %v243, %v242
  %v301 = vpack.c.b16 %v245, %v244
  %v302 = vpack.c.b16 %v247, %v246
  %v303 = vpack.c.b16 %v249, %v248
  %v304 = vpack.c.b16 %v251, %v250
  %v305 = vpack.c.b16 %v253, %v252
  %v306 = vpack.c.b16 %v255, %v254
  %v307 = vpack.c.b16 %v257, %v256
  %v308 = vpack.c.b16 %v259, %v258
  %v309 = vpack.c.b16 %v261, %v260
  %v310 = vpack.c.b16 %v263, %v262
  %v311 = vpack.c.b16 %v265, %v264
  %v312 = vpack.c.b16 %v267, %v266
  %v313 = vpack.c.b16 %v269, %v268
  %v314 = vpack.c.b16 %v271, %v270
  %v315 = vpack.c.b16 %v273, %v272
  %v316 = vpack.c.b16 %v275, %v274
  %v317 = vpack.c.b16 %v276, %v276
  %v375 = vunpack.c.l.b16 %v95
  %v376 = vunpack.c.l.b16 %v96
  %v377 = vunpack.c.l.b16 %v97
  %v378 = vunpack.c.l.b16 %v98
  %v379 = vunpack.c.l.b16 %v99
  %v380 = vunpack.c.l.b16 %v100
  %v381 = vunpack.c.l.b16 %v101
  %v382 = vunpack.c.l.b16 %v102
  %v383 = vunpack.c.l.b16 %v103
  %v384 = vunpack.c.l.b16 %v104
  %v385 = vunpack.c.l.b16 %v105
  %v386 = vunpack.c.l.b16 %v106
  %v387 = vunpack.c.l.b16 %v107
  %v388 = vunpack.c.l.b16 %v108
  %v389 = vunpack.c.l.b16 %v109
  %v390 = vunpack.c.l.b16 %v110
  %v391 = vpack.c.b16 %v376, %v375
  %v392 = vpack.c.b16 %v378, %v377
  %v393 = vpack.c.b16 %v380, %v379
  %v394 = vpack.c.b16 %v382, %v381
  %v395 = vpack.c.b16 %v384, %v383
  %v396 = vpack.c.b16 %v386, %v385
  %v397 = vpack.c.b16 %v388, %v387
  %v398 = vpack.c.b16 %v390, %v389
  %407 = vmatpush.bf16.msra.mxu0 %v398
  %408 = vmatpush.bf16.msra.mxu0 %v397
  %409 = vmatpush.bf16.msra.mxu0 %v396
  %410 = vmatpush.bf16.msra.mxu0 %v395
  %411 = vmatpush.bf16.msra.mxu0 %v394
  %412 = vmatpush.bf16.msra.mxu0 %v393
  %413 = vmatpush.bf16.msra.mxu0 %v392
  %414 = vmatpush.bf16.msra.mxu0 %v391
  %415 = vmatmul.bf16.gmra.mxu0 %v277
  %v416 = vpop.f32.mrf.mxu0
  %v417 = vadd.f32 %v113, %v416
  %v418 = vpop.f32.mrf.mxu0
  %v419 = vadd.f32 %v113, %v418
  %420 = vmatmul.bf16.gmra.mxu0 %v278
  %v421 = vpop.f32.mrf.mxu0
  %v422 = vadd.f32 %v113, %v421
  %v423 = vpop.f32.mrf.mxu0
  %v424 = vadd.f32 %v113, %v423
  %425 = vmatmul.bf16.gmra.mxu0 %v279
  %v426 = vpop.f32.mrf.mxu0
  %v427 = vadd.f32 %v113, %v426
  %v428 = vpop.f32.mrf.mxu0
  %v429 = vadd.f32 %v113, %v428
  %430 = vmatmul.bf16.gmra.mxu0 %v280
  %v431 = vpop.f32.mrf.mxu0
  %v432 = vadd.f32 %v113, %v431
  %v433 = vpop.f32.mrf.mxu0
  %v434 = vadd.f32 %v113, %v433
  %435 = vmatmul.bf16.gmra.mxu0 %v281
  %v436 = vpop.f32.mrf.mxu0
  %v437 = vadd.f32 %v113, %v436
  %v438 = vpop.f32.mrf.mxu0
  %v439 = vadd.f32 %v113, %v438
  %440 = vmatmul.bf16.gmra.mxu0 %v282
  %v441 = vpop.f32.mrf.mxu0
  %v442 = vadd.f32 %v113, %v441
  %v443 = vpop.f32.mrf.mxu0
  %v444 = vadd.f32 %v113, %v443
  %445 = vmatmul.bf16.gmra.mxu0 %v283
  %v446 = vpop.f32.mrf.mxu0
  %v447 = vadd.f32 %v113, %v446
  %v448 = vpop.f32.mrf.mxu0
  %v449 = vadd.f32 %v113, %v448
  %450 = vmatmul.bf16.gmra.mxu0 %v284
  %v451 = vpop.f32.mrf.mxu0
  %v452 = vadd.f32 %v113, %v451
  %v453 = vpop.f32.mrf.mxu0
  %v454 = vadd.f32 %v113, %v453
  %455 = vmatmul.bf16.gmra.mxu0 %v285
  %v456 = vpop.f32.mrf.mxu0
  %v457 = vadd.f32 %v113, %v456
  %v458 = vpop.f32.mrf.mxu0
  %v459 = vadd.f32 %v113, %v458
  %460 = vmatmul.bf16.gmra.mxu0 %v286
  %v461 = vpop.f32.mrf.mxu0
  %v462 = vadd.f32 %v113, %v461
  %v463 = vpop.f32.mrf.mxu0
  %v464 = vadd.f32 %v113, %v463
  %465 = vmatmul.bf16.gmra.mxu0 %v287
  %v466 = vpop.f32.mrf.mxu0
  %v467 = vadd.f32 %v113, %v466
  %v468 = vpop.f32.mrf.mxu0
  %v469 = vadd.f32 %v113, %v468
  %470 = vmatmul.bf16.gmra.mxu0 %v288
  %v471 = vpop.f32.mrf.mxu0
  %v472 = vadd.f32 %v113, %v471
  %v473 = vpop.f32.mrf.mxu0
  %v474 = vadd.f32 %v113, %v473
  %475 = vmatmul.bf16.gmra.mxu0 %v289
  %v476 = vpop.f32.mrf.mxu0
  %v477 = vadd.f32 %v113, %v476
  %v478 = vpop.f32.mrf.mxu0
  %v479 = vadd.f32 %v113, %v478
  %480 = vmatmul.bf16.gmra.mxu0 %v290
  %v481 = vpop.f32.mrf.mxu0
  %v482 = vadd.f32 %v113, %v481
  %v483 = vpop.f32.mrf.mxu0
  %v484 = vadd.f32 %v113, %v483
  %485 = vmatmul.bf16.gmra.mxu0 %v291
  %v486 = vpop.f32.mrf.mxu0
  %v487 = vadd.f32 %v113, %v486
  %v488 = vpop.f32.mrf.mxu0
  %v489 = vadd.f32 %v113, %v488
  %490 = vmatmul.bf16.gmra.mxu0 %v292
  %v491 = vpop.f32.mrf.mxu0
  %v492 = vadd.f32 %v113, %v491
  %v493 = vpop.f32.mrf.mxu0
  %v494 = vadd.f32 %v113, %v493
  %495 = vmatmul.bf16.gmra.mxu0 %v293
  %v496 = vpop.f32.mrf.mxu0
  %v497 = vadd.f32 %v113, %v496
  %v498 = vpop.f32.mrf.mxu0
  %v499 = vadd.f32 %v113, %v498
  %500 = vmatmul.bf16.gmra.mxu0 %v294
  %v501 = vpop.f32.mrf.mxu0
  %v502 = vadd.f32 %v113, %v501
  %v503 = vpop.f32.mrf.mxu0
  %v504 = vadd.f32 %v113, %v503
  %505 = vmatmul.bf16.gmra.mxu0 %v295
  %v506 = vpop.f32.mrf.mxu0
  %v507 = vadd.f32 %v113, %v506
  %v508 = vpop.f32.mrf.mxu0
  %v509 = vadd.f32 %v113, %v508
  %510 = vmatmul.bf16.gmra.mxu0 %v296
  %v511 = vpop.f32.mrf.mxu0
  %v512 = vadd.f32 %v113, %v511
  %v513 = vpop.f32.mrf.mxu0
  %v514 = vadd.f32 %v113, %v513
  %515 = vmatmul.bf16.gmra.mxu0 %v297
  %v516 = vpop.f32.mrf.mxu0
  %v517 = vadd.f32 %v113, %v516
  %v518 = vpop.f32.mrf.mxu0
  %v519 = vadd.f32 %v113, %v518
  %520 = vmatmul.bf16.gmra.mxu0 %v298
  %v521 = vpop.f32.mrf.mxu0
  %v522 = vadd.f32 %v113, %v521
  %v523 = vpop.f32.mrf.mxu0
  %v524 = vadd.f32 %v113, %v523
  %525 = vmatmul.bf16.gmra.mxu0 %v299
  %v526 = vpop.f32.mrf.mxu0
  %v527 = vadd.f32 %v113, %v526
  %v528 = vpop.f32.mrf.mxu0
  %v529 = vadd.f32 %v113, %v528
  %530 = vmatmul.bf16.gmra.mxu0 %v300
  %v531 = vpop.f32.mrf.mxu0
  %v532 = vadd.f32 %v113, %v531
  %v533 = vpop.f32.mrf.mxu0
  %v534 = vadd.f32 %v113, %v533
  %535 = vmatmul.bf16.gmra.mxu0 %v301
  %v536 = vpop.f32.mrf.mxu0
  %v537 = vadd.f32 %v113, %v536
  %v538 = vpop.f32.mrf.mxu0
  %v539 = vadd.f32 %v113, %v538
  %540 = vmatmul.bf16.gmra.mxu0 %v302
  %v541 = vpop.f32.mrf.mxu0
  %v542 = vadd.f32 %v113, %v541
  %v543 = vpop.f32.mrf.mxu0
  %v544 = vadd.f32 %v113, %v543
  %545 = vmatmul.bf16.gmra.mxu0 %v303
  %v546 = vpop.f32.mrf.mxu0
  %v547 = vadd.f32 %v113, %v546
  %v548 = vpop.f32.mrf.mxu0
  %v549 = vadd.f32 %v113, %v548
  %550 = vmatmul.bf16.gmra.mxu0 %v304
  %v551 = vpop.f32.mrf.mxu0
  %v552 = vadd.f32 %v113, %v551
  %v553 = vpop.f32.mrf.mxu0
  %v554 = vadd.f32 %v113, %v553
  %555 = vmatmul.bf16.gmra.mxu0 %v305
  %v556 = vpop.f32.mrf.mxu0
  %v557 = vadd.f32 %v113, %v556
  %v558 = vpop.f32.mrf.mxu0
  %v559 = vadd.f32 %v113, %v558
  %560 = vmatmul.bf16.gmra.mxu0 %v306
  %v561 = vpop.f32.mrf.mxu0
  %v562 = vadd.f32 %v113, %v561
  %v563 = vpop.f32.mrf.mxu0
  %v564 = vadd.f32 %v113, %v563
  %565 = vmatmul.bf16.gmra.mxu0 %v307
  %v566 = vpop.f32.mrf.mxu0
  %v567 = vadd.f32 %v113, %v566
  %v568 = vpop.f32.mrf.mxu0
  %v569 = vadd.f32 %v113, %v568
  %570 = vmatmul.bf16.gmra.mxu0 %v308
  %v571 = vpop.f32.mrf.mxu0
  %v572 = vadd.f32 %v113, %v571
  %v573 = vpop.f32.mrf.mxu0
  %v574 = vadd.f32 %v113, %v573
  %575 = vmatmul.bf16.gmra.mxu0 %v309
  %v576 = vpop.f32.mrf.mxu0
  %v577 = vadd.f32 %v113, %v576
  %v578 = vpop.f32.mrf.mxu0
  %v579 = vadd.f32 %v113, %v578
  %580 = vmatmul.bf16.gmra.mxu0 %v310
  %v581 = vpop.f32.mrf.mxu0
  %v582 = vadd.f32 %v113, %v581
  %v583 = vpop.f32.mrf.mxu0
  %v584 = vadd.f32 %v113, %v583
  %585 = vmatmul.bf16.gmra.mxu0 %v311
  %v586 = vpop.f32.mrf.mxu0
  %v587 = vadd.f32 %v113, %v586
  %v588 = vpop.f32.mrf.mxu0
  %v589 = vadd.f32 %v113, %v588
  %590 = vmatmul.bf16.gmra.mxu0 %v312
  %v591 = vpop.f32.mrf.mxu0
  %v592 = vadd.f32 %v113, %v591
  %v593 = vpop.f32.mrf.mxu0
  %v594 = vadd.f32 %v113, %v593
  %595 = vmatmul.bf16.gmra.mxu0 %v313
  %v596 = vpop.f32.mrf.mxu0
  %v597 = vadd.f32 %v113, %v596
  %v598 = vpop.f32.mrf.mxu0
  %v599 = vadd.f32 %v113, %v598
  %600 = vmatmul.bf16.gmra.mxu0 %v314
  %v601 = vpop.f32.mrf.mxu0
  %v602 = vadd.f32 %v113, %v601
  %v603 = vpop.f32.mrf.mxu0
  %v604 = vadd.f32 %v113, %v603
  %605 = vmatmul.bf16.gmra.mxu0 %v315
  %v606 = vpop.f32.mrf.mxu0
  %v607 = vadd.f32 %v113, %v606
  %v608 = vpop.f32.mrf.mxu0
  %v609 = vadd.f32 %v113, %v608
  %610 = vmatmul.bf16.gmra.mxu0 %v316
  %v611 = vpop.f32.mrf.mxu0
  %v612 = vadd.f32 %v113, %v611
  %v613 = vpop.f32.mrf.mxu0
  %v614 = vadd.f32 %v113, %v613
  %615 = vmatmul.bf16.gmra.mxu0 %v317
  %v616 = vpop.f32.mrf.mxu0
  %v617 = vadd.f32 %v113, %v616
  %v618 = vpop.f32.mrf.mxu0
  %619 = vdwg.mxu0
  %v620 = vmax.f32 %v417, 0.0
  %v621 = vmax.f32 %v419, 0.0
  %v622 = vmax.f32 %v422, 0.0
  %v623 = vmax.f32 %v424, 0.0
  %v624 = vmax.f32 %v427, 0.0
  %v625 = vmax.f32 %v429, 0.0
  %v626 = vmax.f32 %v432, 0.0
  %v627 = vmax.f32 %v434, 0.0
  %v628 = vmax.f32 %v437, 0.0
  %v629 = vmax.f32 %v439, 0.0
  %v630 = vmax.f32 %v442, 0.0
  %v631 = vmax.f32 %v444, 0.0
  %v632 = vmax.f32 %v447, 0.0
  %v633 = vmax.f32 %v449, 0.0
  %v634 = vmax.f32 %v452, 0.0
  %v635 = vmax.f32 %v454, 0.0
  %v636 = vmax.f32 %v457, 0.0
  %v637 = vmax.f32 %v459, 0.0
  %v638 = vmax.f32 %v462, 0.0
  %v639 = vmax.f32 %v464, 0.0
  %v640 = vmax.f32 %v467, 0.0
  %v641 = vmax.f32 %v469, 0.0
  %v642 = vmax.f32 %v472, 0.0
  %v643 = vmax.f32 %v474, 0.0
  %v644 = vmax.f32 %v477, 0.0
  %v645 = vmax.f32 %v479, 0.0
  %v646 = vmax.f32 %v482, 0.0
  %v647 = vmax.f32 %v484, 0.0
  %v648 = vmax.f32 %v487, 0.0
  %v649 = vmax.f32 %v489, 0.0
  %v650 = vmax.f32 %v492, 0.0
  %v651 = vmax.f32 %v494, 0.0
  %v652 = vmax.f32 %v497, 0.0
  %v653 = vmax.f32 %v499, 0.0
  %v654 = vmax.f32 %v502, 0.0
  %v655 = vmax.f32 %v504, 0.0
  %v656 = vmax.f32 %v507, 0.0
  %v657 = vmax.f32 %v509, 0.0
  %v658 = vmax.f32 %v512, 0.0
  %v659 = vmax.f32 %v514, 0.0
  %v660 = vmax.f32 %v517, 0.0
  %v661 = vmax.f32 %v519, 0.0
  %v662 = vmax.f32 %v522, 0.0
  %v663 = vmax.f32 %v524, 0.0
  %v664 = vmax.f32 %v527, 0.0
  %v665 = vmax.f32 %v529, 0.0
  %v666 = vmax.f32 %v532, 0.0
  %v667 = vmax.f32 %v534, 0.0
  %v668 = vmax.f32 %v537, 0.0
  %v669 = vmax.f32 %v539, 0.0
  %v670 = vmax.f32 %v542, 0.0
  %v671 = vmax.f32 %v544, 0.0
  %v672 = vmax.f32 %v547, 0.0
  %v673 = vmax.f32 %v549, 0.0
  %v674 = vmax.f32 %v552, 0.0
  %v675 = vmax.f32 %v554, 0.0
  %v676 = vmax.f32 %v557, 0.0
  %v677 = vmax.f32 %v559, 0.0
  %v678 = vmax.f32 %v562, 0.0
  %v679 = vmax.f32 %v564, 0.0
  %v680 = vmax.f32 %v567, 0.0
  %v681 = vmax.f32 %v569, 0.0
  %v682 = vmax.f32 %v572, 0.0
  %v683 = vmax.f32 %v574, 0.0
  %v684 = vmax.f32 %v577, 0.0
  %v685 = vmax.f32 %v579, 0.0
  %v686 = vmax.f32 %v582, 0.0
  %v687 = vmax.f32 %v584, 0.0
  %v688 = vmax.f32 %v587, 0.0
  %v689 = vmax.f32 %v589, 0.0
  %v690 = vmax.f32 %v592, 0.0
  %v691 = vmax.f32 %v594, 0.0
  %v692 = vmax.f32 %v597, 0.0
  %v693 = vmax.f32 %v599, 0.0
  %v694 = vmax.f32 %v602, 0.0
  %v695 = vmax.f32 %v604, 0.0
  %v696 = vmax.f32 %v607, 0.0
  %v697 = vmax.f32 %v609, 0.0
  %v698 = vmax.f32 %v612, 0.0
  %v699 = vmax.f32 %v614, 0.0
  %v700 = vmax.f32 %v617, 0.0
  %v701 = vpack.c.bf16 %v620, %v620
  %v702 = vpack.c.bf16 %v621, %v621
  %v703 = vpack.c.bf16 %v622, %v622
  %v704 = vpack.c.bf16 %v623, %v623
  %v705 = vpack.c.bf16 %v624, %v624
  %v706 = vpack.c.bf16 %v625, %v625
  %v707 = vpack.c.bf16 %v626, %v626
  %v708 = vpack.c.bf16 %v627, %v627
  %v709 = vpack.c.bf16 %v628, %v628
  %v710 = vpack.c.bf16 %v629, %v629
  %v711 = vpack.c.bf16 %v630, %v630
  %v712 = vpack.c.bf16 %v631, %v631
  %v713 = vpack.c.bf16 %v632, %v632
  %v714 = vpack.c.bf16 %v633, %v633
  %v715 = vpack.c.bf16 %v634, %v634
  %v716 = vpack.c.bf16 %v635, %v635
  %v717 = vpack.c.bf16 %v636, %v636
  %v718 = vpack.c.bf16 %v637, %v637
  %v719 = vpack.c.bf16 %v638, %v638
  %v720 = vpack.c.bf16 %v639, %v639
  %v721 = vpack.c.bf16 %v640, %v640
  %v722 = vpack.c.bf16 %v641, %v641
  %v723 = vpack.c.bf16 %v642, %v642
  %v724 = vpack.c.bf16 %v643, %v643
  %v725 = vpack.c.bf16 %v644, %v644
  %v726 = vpack.c.bf16 %v645, %v645
  %v727 = vpack.c.bf16 %v646, %v646
  %v728 = vpack.c.bf16 %v647, %v647
  %v729 = vpack.c.bf16 %v648, %v648
  %v730 = vpack.c.bf16 %v649, %v649
  %v731 = vpack.c.bf16 %v650, %v650
  %v732 = vpack.c.bf16 %v651, %v651
  %v733 = vpack.c.bf16 %v652, %v652
  %v734 = vpack.c.bf16 %v653, %v653
  %v735 = vpack.c.bf16 %v654, %v654
  %v736 = vpack.c.bf16 %v655, %v655
  %v737 = vpack.c.bf16 %v656, %v656
  %v738 = vpack.c.bf16 %v657, %v657
  %v739 = vpack.c.bf16 %v658, %v658
  %v740 = vpack.c.bf16 %v659, %v659
  %v741 = vpack.c.bf16 %v660, %v660
  %v742 = vpack.c.bf16 %v661, %v661
  %v743 = vpack.c.bf16 %v662, %v662
  %v744 = vpack.c.bf16 %v663, %v663
  %v745 = vpack.c.bf16 %v664, %v664
  %v746 = vpack.c.bf16 %v665, %v665
  %v747 = vpack.c.bf16 %v666, %v666
  %v748 = vpack.c.bf16 %v667, %v667
  %v749 = vpack.c.bf16 %v668, %v668
  %v750 = vpack.c.bf16 %v669, %v669
  %v751 = vpack.c.bf16 %v670, %v670
  %v752 = vpack.c.bf16 %v671, %v671
  %v753 = vpack.c.bf16 %v672, %v672
  %v754 = vpack.c.bf16 %v673, %v673
  %v755 = vpack.c.bf16 %v674, %v674
  %v756 = vpack.c.bf16 %v675, %v675
  %v757 = vpack.c.bf16 %v676, %v676
  %v758 = vpack.c.bf16 %v677, %v677
  %v759 = vpack.c.bf16 %v678, %v678
  %v760 = vpack.c.bf16 %v679, %v679
  %v761 = vpack.c.bf16 %v680, %v680
  %v762 = vpack.c.bf16 %v681, %v681
  %v763 = vpack.c.bf16 %v682, %v682
  %v764 = vpack.c.bf16 %v683, %v683
  %v765 = vpack.c.bf16 %v684, %v684
  %v766 = vpack.c.bf16 %v685, %v685
  %v767 = vpack.c.bf16 %v686, %v686
  %v768 = vpack.c.bf16 %v687, %v687
  %v769 = vpack.c.bf16 %v688, %v688
  %v770 = vpack.c.bf16 %v689, %v689
  %v771 = vpack.c.bf16 %v690, %v690
  %v772 = vpack.c.bf16 %v691, %v691
  %v773 = vpack.c.bf16 %v692, %v692
  %v774 = vpack.c.bf16 %v693, %v693
  %v775 = vpack.c.bf16 %v694, %v694
  %v776 = vpack.c.bf16 %v695, %v695
  %v777 = vpack.c.bf16 %v696, %v696
  %v778 = vpack.c.bf16 %v697, %v697
  %v779 = vpack.c.bf16 %v698, %v698
  %v780 = vpack.c.bf16 %v699, %v699
  %v781 = vpack.c.bf16 %v700, %v700
  %vm782 = vcmask 125952
  %783 = vst.msk [vmem:[%s3] sm:$0xf] %vm782, %v701
  %784 = vst.msk [vmem:[%s3 + $0x4] sm:$0xf] %vm782, %v702
  %785 = vst.msk [vmem:[%s3 + $0x8] sm:$0xf] %vm782, %v703
  %786 = vst.msk [vmem:[%s3 + $0xc] sm:$0xf] %vm782, %v704
  %787 = vst.msk [vmem:[%s3 + $0x10] sm:$0xf] %vm782, %v705
  %788 = vst.msk [vmem:[%s3 + $0x14] sm:$0xf] %vm782, %v706
  %789 = vst.msk [vmem:[%s3 + $0x18] sm:$0xf] %vm782, %v707
  %790 = vst.msk [vmem:[%s3 + $0x1c] sm:$0xf] %vm782, %v708
  %791 = vst.msk [vmem:[%s3 + $0x20] sm:$0xf] %vm782, %v709
  %792 = vst.msk [vmem:[%s3 + $0x24] sm:$0xf] %vm782, %v710
  %793 = vst.msk [vmem:[%s3 + $0x28] sm:$0xf] %vm782, %v711
  %794 = vst.msk [vmem:[%s3 + $0x2c] sm:$0xf] %vm782, %v712
  %795 = vst.msk [vmem:[%s3 + $0x30] sm:$0xf] %vm782, %v713
  %796 = vst.msk [vmem:[%s3 + $0x34] sm:$0xf] %vm782, %v714
  %797 = vst.msk [vmem:[%s3 + $0x38] sm:$0xf] %vm782, %v715
  %798 = vst.msk [vmem:[%s3 + $0x3c] sm:$0xf] %vm782, %v716
  %799 = vst.msk [vmem:[%s3 + $0x40] sm:$0xf] %vm782, %v717
  %800 = vst.msk [vmem:[%s3 + $0x44] sm:$0xf] %vm782, %v718
  %801 = vst.msk [vmem:[%s3 + $0x48] sm:$0xf] %vm782, %v719
  %802 = vst.msk [vmem:[%s3 + $0x4c] sm:$0xf] %vm782, %v720
  %803 = vst.msk [vmem:[%s3 + $0x50] sm:$0xf] %vm782, %v721
  %804 = vst.msk [vmem:[%s3 + $0x54] sm:$0xf] %vm782, %v722
  %805 = vst.msk [vmem:[%s3 + $0x58] sm:$0xf] %vm782, %v723
  %806 = vst.msk [vmem:[%s3 + $0x5c] sm:$0xf] %vm782, %v724
  %807 = vst.msk [vmem:[%s3 + $0x60] sm:$0xf] %vm782, %v725
  %808 = vst.msk [vmem:[%s3 + $0x64] sm:$0xf] %vm782, %v726
  %809 = vst.msk [vmem:[%s3 + $0x68] sm:$0xf] %vm782, %v727
  %810 = vst.msk [vmem:[%s3 + $0x6c] sm:$0xf] %vm782, %v728
  %811 = vst.msk [vmem:[%s3 + $0x70] sm:$0xf] %vm782, %v729
  %812 = vst.msk [vmem:[%s3 + $0x74] sm:$0xf] %vm782, %v730
  %813 = vst.msk [vmem:[%s3 + $0x78] sm:$0xf] %vm782, %v731
  %814 = vst.msk [vmem:[%s3 + $0x7c] sm:$0xf] %vm782, %v732
  %815 = vst.msk [vmem:[%s3 + $0x80] sm:$0xf] %vm782, %v733
  %816 = vst.msk [vmem:[%s3 + $0x84] sm:$0xf] %vm782, %v734
  %817 = vst.msk [vmem:[%s3 + $0x88] sm:$0xf] %vm782, %v735
  %818 = vst.msk [vmem:[%s3 + $0x8c] sm:$0xf] %vm782, %v736
  %819 = vst.msk [vmem:[%s3 + $0x90] sm:$0xf] %vm782, %v737
  %820 = vst.msk [vmem:[%s3 + $0x94] sm:$0xf] %vm782, %v738
  %821 = vst.msk [vmem:[%s3 + $0x98] sm:$0xf] %vm782, %v739
  %822 = vst.msk [vmem:[%s3 + $0x9c] sm:$0xf] %vm782, %v740
  %823 = vst.msk [vmem:[%s3 + $0xa0] sm:$0xf] %vm782, %v741
  %824 = vst.msk [vmem:[%s3 + $0xa4] sm:$0xf] %vm782, %v742
  %825 = vst.msk [vmem:[%s3 + $0xa8] sm:$0xf] %vm782, %v743
  %826 = vst.msk [vmem:[%s3 + $0xac] sm:$0xf] %vm782, %v744
  %827 = vst.msk [vmem:[%s3 + $0xb0] sm:$0xf] %vm782, %v745
  %828 = vst.msk [vmem:[%s3 + $0xb4] sm:$0xf] %vm782, %v746
  %829 = vst.msk [vmem:[%s3 + $0xb8] sm:$0xf] %vm782, %v747
  %830 = vst.msk [vmem:[%s3 + $0xbc] sm:$0xf] %vm782, %v748
  %831 = vst.msk [vmem:[%s3 + $0xc0] sm:$0xf] %vm782, %v749
  %832 = vst.msk [vmem:[%s3 + $0xc4] sm:$0xf] %vm782, %v750
  %833 = vst.msk [vmem:[%s3 + $0xc8] sm:$0xf] %vm782, %v751
  %834 = vst.msk [vmem:[%s3 + $0xcc] sm:$0xf] %vm782, %v752
  %835 = vst.msk [vmem:[%s3 + $0xd0] sm:$0xf] %vm782, %v753
  %836 = vst.msk [vmem:[%s3 + $0xd4] sm:$0xf] %vm782, %v754
  %837 = vst.msk [vmem:[%s3 + $0xd8] sm:$0xf] %vm782, %v755
  %838 = vst.msk [vmem:[%s3 + $0xdc] sm:$0xf] %vm782, %v756
  %839 = vst.msk [vmem:[%s3 + $0xe0] sm:$0xf] %vm782, %v757
  %840 = vst.msk [vmem:[%s3 + $0xe4] sm:$0xf] %vm782, %v758
  %841 = vst.msk [vmem:[%s3 + $0xe8] sm:$0xf] %vm782, %v759
  %842 = vst.msk [vmem:[%s3 + $0xec] sm:$0xf] %vm782, %v760
  %843 = vst.msk [vmem:[%s3 + $0xf0] sm:$0xf] %vm782, %v761
  %844 = vst.msk [vmem:[%s3 + $0xf4] sm:$0xf] %vm782, %v762
  %845 = vst.msk [vmem:[%s3 + $0xf8] sm:$0xf] %vm782, %v763
  %846 = vst.msk [vmem:[%s3 + $0xfc] sm:$0xf] %vm782, %v764
  %847 = vst.msk [vmem:[%s3 + $0x100] sm:$0xf] %vm782, %v765
  %848 = vst.msk [vmem:[%s3 + $0x104] sm:$0xf] %vm782, %v766
  %849 = vst.msk [vmem:[%s3 + $0x108] sm:$0xf] %vm782, %v767
  %850 = vst.msk [vmem:[%s3 + $0x10c] sm:$0xf] %vm782, %v768
  %851 = vst.msk [vmem:[%s3 + $0x110] sm:$0xf] %vm782, %v769
  %852 = vst.msk [vmem:[%s3 + $0x114] sm:$0xf] %vm782, %v770
  %853 = vst.msk [vmem:[%s3 + $0x118] sm:$0xf] %vm782, %v771
  %854 = vst.msk [vmem:[%s3 + $0x11c] sm:$0xf] %vm782, %v772
  %855 = vst.msk [vmem:[%s3 + $0x120] sm:$0xf] %vm782, %v773
  %856 = vst.msk [vmem:[%s3 + $0x124] sm:$0xf] %vm782, %v774
  %857 = vst.msk [vmem:[%s3 + $0x128] sm:$0xf] %vm782, %v775
  %858 = vst.msk [vmem:[%s3 + $0x12c] sm:$0xf] %vm782, %v776
  %859 = vst.msk [vmem:[%s3 + $0x130] sm:$0xf] %vm782, %v777
  %860 = vst.msk [vmem:[%s3 + $0x134] sm:$0xf] %vm782, %v778
  %861 = vst.msk [vmem:[%s3 + $0x138] sm:$0xf] %vm782, %v779
  %862 = vst.msk [vmem:[%s3 + $0x13c] sm:$0xf] %vm782, %v780
  %863 = vst.msk [vmem:[%s3 + $0x140] sm:$0xf] %vm782, %v781
  // Predicated region
  $region14: #{dqn_forward.4} parent=0 // pred_check
    _
  $region15: #{dqn_forward.4} parent=0 // pred_check_branch
    %865 = sbr.rel (0) target = $region17
  $region16: #{dqn_forward.4} parent=0 // pred_region
    _
  $region17: #{dqn_forward.4} parent=0 // pred_fallthru
    _
  // Predicated region
  $region18: #{dqn_forward.4} parent=0 // pred_check
    _
  $region19: #{dqn_forward.4} parent=0 // pred_check_branch
    %867 = sbr.rel (0) target = $region21
  $region20: #{dqn_forward.4} parent=0 // pred_region
    _
  $region21: #{dqn_forward.4} parent=0 // pred_fallthru
    _

// kernel: dqn_forward.5
$region0: #{dqn_forward.5}
  #allocation0 [shape = 'u32[]', space=smem, size = 0x4, offset = 0x4, fixed_abs, tag = 'smem constant byte address 0x4 - core index']
  #allocation1 [shape = 'u32[72,128]{1,0:T(1,128)}', space=vmem, size = 0x9000, scoped, tag = 'internal scratch']
  %s0 = inlined_call_operand.vmem [shape: bf16[98,512], index: 0, kind: input, shape index: {}]
  %s1 = inlined_call_operand.vmem [shape: bf16[512,32], index: 1, kind: input, shape index: {}]
  %s2 = inlined_call_operand.vmem [shape: f32[1,32], index: 2, kind: input, shape index: {}]
  %s3 = inlined_call_operand.vmem [shape: bf16[98,32], index: 3, kind: output, shape index: {}]
  %s4 = sld [smem:[#allocation0]]
  $region22: #{dqn_forward.5} parent=0
    _
  %s6 = ssub.s32 1, %s4
  %s7 = scalar_select 0, %s6, %s4
  // Predicated region
  $region2: #{dqn_forward.5} parent=0 // pred_check
    _
  $region3: #{dqn_forward.5} parent=0 // pred_check_branch
    %9 = sbr.rel (0) target = $region5
  $region4: #{dqn_forward.5} parent=0 // pred_region
    _
  $region5: #{dqn_forward.5} parent=0 // pred_fallthru
    _
  // Predicated region
  $region6: #{dqn_forward.5} parent=0 // pred_check
    _
  $region7: #{dqn_forward.5} parent=0 // pred_check_branch
    %11 = sbr.rel (0) target = $region9
  $region8: #{dqn_forward.5} parent=0 // pred_region
    _
  $region9: #{dqn_forward.5} parent=0 // pred_fallthru
    _
  // Predicated region
  $region10: #{dqn_forward.5} parent=0 // pred_check
    _
  $region11: #{dqn_forward.5} parent=0 // pred_check_branch
    %13 = sbr.rel (0) target = $region13
  $region12: #{dqn_forward.5} parent=0 // pred_region
    _
  $region13: #{dqn_forward.5} parent=0 // pred_fallthru
    _
  %v14 = vld [vmem:[%s0] sm:$0xff]
  %v15 = vld [vmem:[%s0 + $0x8] sm:$0xff]
  %v16 = vld [vmem:[%s0 + $0x10] sm:$0xff]
  %v17 = vld [vmem:[%s0 + $0x18] sm:$0xff]
  %v18 = vld [vmem:[%s0 + $0x20] sm:$0xff]
  %v19 = vld [vmem:[%s0 + $0x28] sm:$0xff]
  %v20 = vld [vmem:[%s0 + $0x30] sm:$0xff]
  %v21 = vld [vmem:[%s0 + $0x38] sm:$0xff]
  %v22 = vld [vmem:[%s0 + $0x40] sm:$0xff]
  %v23 = vld [vmem:[%s0 + $0x48] sm:$0xff]
  %v24 = vld [vmem:[%s0 + $0x50] sm:$0xff]
  %v25 = vld [vmem:[%s0 + $0x58] sm:$0xff]
  %v26 = vld [vmem:[%s0 + $0x60] sm:$0xff]
  %v27 = vld [vmem:[%s0 + $0x68] sm:$0xff]
  %v28 = vld [vmem:[%s0 + $0x70] sm:$0xff]
  %v29 = vld [vmem:[%s0 + $0x78] sm:$0xff]
  %v30 = vld [vmem:[%s0 + $0x80] sm:$0xff]
  %v31 = vld [vmem:[%s0 + $0x88] sm:$0xff]
  %v32 = vld [vmem:[%s0 + $0x90] sm:$0xff]
  %v33 = vld [vmem:[%s0 + $0x98] sm:$0xff]
  %v34 = vld [vmem:[%s0 + $0xa0] sm:$0xff]
  %v35 = vld [vmem:[%s0 + $0xa8] sm:$0xff]
  %v36 = vld [vmem:[%s0 + $0xb0] sm:$0xff]
  %v37 = vld [vmem:[%s0 + $0xb8] sm:$0xff]
  %v38 = vld [vmem:[%s0 + $0xc0] sm:$0x11]
  %v39 = vld [vmem:[%s0 + $0xc8] sm:$0x11]
  %v40 = vld [vmem:[%s1] sm:$0xf]
  %v41 = vld [vmem:[%s1 + $0x4] sm:$0xf]
  %v42 = vld [vmem:[%s1 + $0x8] sm:$0xf]
  %v43 = vld [vmem:[%s1 + $0xc] sm:$0xf]
  %v44 = vld [vmem:[%s1 + $0x10] sm:$0xf]
  %v45 = vld [vmem:[%s1 + $0x14] sm:$0xf]
  %v46 = vld [vmem:[%s1 + $0x18] sm:$0xf]
  %v47 = vld [vmem:[%s1 + $0x1c] sm:$0xf]
  %v48 = vld [vmem:[%s1 + $0x20] sm:$0xf]
  %v49 = vld [vmem:[%s1 + $0x24] sm:$0xf]
  %v50 = vld [vmem:[%s1 + $0x28] sm:$0xf]
  %v51 = vld [vmem:[%s1 + $0x2c] sm:$0xf]
  %v52 = vld [vmem:[%s1 + $0x30] sm:$0xf]
  %v53 = vld [vmem:[%s1 + $0x34] sm:$0xf]
  %v54 = vld [vmem:[%s1 + $0x38] sm:$0xf]
  %v55 = vld [vmem:[%s1 + $0x3c] sm:$0xf]
  %v56 = vld [vmem:[%s1 + $0x40] sm:$0xf]
  %v57 = vld [vmem:[%s1 + $0x44] sm:$0xf]
  %v58 = vld [vmem:[%s1 + $0x48] sm:$0xf]
  %v59 = vld [vmem:[%s1 + $0x4c] sm:$0xf]
  %v60 = vld [vmem:[%s1 + $0x50] sm:$0xf]
  %v61 = vld [vmem:[%s1 + $0x54] sm:$0xf]
  %v62 = vld [vmem:[%s1 + $0x58] sm:$0xf]
  %v63 = vld [vmem:[%s1 + $0x5c] sm:$0xf]
  %v64 = vld [vmem:[%s1 + $0x60] sm:$0xf]
  %v65 = vld [vmem:[%s1 + $0x64] sm:$0xf]
  %v66 = vld [vmem:[%s1 + $0x68] sm:$0xf]
  %v67 = vld [vmem:[%s1 + $0x6c] sm:$0xf]
  %v68 = vld [vmem:[%s1 + $0x70] sm:$0xf]
  %v69 = vld [vmem:[%s1 + $0x74] sm:$0xf]
  %v70 = vld [vmem:[%s1 + $0x78] sm:$0xf]
  %v71 = vld [vmem:[%s1 + $0x7c] sm:$0xf]
  %v72 = vld [vmem:[%s1 + $0x80] sm:$0xf]
  %v73 = vld [vmem:[%s1 + $0x84] sm:$0xf]
  %v74 = vld [vmem:[%s1 + $0x88] sm:$0xf]
  %v75 = vld [vmem:[%s1 + $0x8c] sm:$0xf]
  %v76 = vld [vmem:[%s1 + $0x90] sm:$0xf]
  %v77 = vld [vmem:[%s1 + $0x94] sm:$0xf]
  %v78 = vld [vmem:[%s1 + $0x98] sm:$0xf]
  %v79 = vld [vmem:[%s1 + $0x9c] sm:$0xf]
  %v80 = vld [vmem:[%s1 + $0xa0] sm:$0xf]
  %v81 = vld [vmem:[%s1 + $0xa4] sm:$0xf]
  %v82 = vld [vmem:[%s1 + $0xa8] sm:$0xf]
  %v83 = vld [vmem:[%s1 + $0xac] sm:$0xf]
  %v84 = vld [vmem:[%s1 + $0xb0] sm:$0xf]
  %v85 = vld [vmem:[%s1 + $0xb4] sm:$0xf]
  %v86 = vld [vmem:[%s1 + $0xb8] sm:$0xf]
  %v87 = vld [vmem:[%s1 + $0xbc] sm:$0xf]
  %v88 = vld [vmem:[%s1 + $0xc0] sm:$0xf]
  %v89 = vld [vmem:[%s1 + $0xc4] sm:$0xf]
  %v90 = vld [vmem:[%s1 + $0xc8] sm:$0xf]
  %v91 = vld [vmem:[%s1 + $0xcc] sm:$0xf]
  %v92 = vld [vmem:[%s1 + $0xd0] sm:$0xf]
  %v93 = vld [vmem:[%s1 + $0xd4] sm:$0xf]
  %v94 = vld [vmem:[%s1 + $0xd8] sm:$0xf]
  %v95 = vld [vmem:[%s1 + $0xdc] sm:$0xf]
  %v96 = vld [vmem:[%s1 + $0xe0] sm:$0xf]
  %v97 = vld [vmem:[%s1 + $0xe4] sm:$0xf]
  %v98 = vld [vmem:[%s1 + $0xe8] sm:$0xf]
  %v99 = vld [vmem:[%s1 + $0xec] sm:$0xf]
  %v100 = vld [vmem:[%s1 + $0xf0] sm:$0xf]
  %v101 = vld [vmem:[%s1 + $0xf4] sm:$0xf]
  %v102 = vld [vmem:[%s1 + $0xf8] sm:$0xf]
  %v103 = vld [vmem:[%s1 + $0xfc] sm:$0xf]
  %v104 = vld [vmem:[%s2] sm:$0x1]
  %v106 = vperm.slane %v104, 0
  %v134 = vunpack.c.l.b16 %v14
  %v135 = vunpack.c.h.b16 %v14
  %v136 = vunpack.c.l.b16 %v15
  %v137 = vunpack.c.h.b16 %v15
  %v138 = vunpack.c.l.b16 %v16
  %v139 = vunpack.c.h.b16 %v16
  %v140 = vunpack.c.l.b16 %v17
  %v141 = vunpack.c.h.b16 %v17
  %v142 = vunpack.c.l.b16 %v18
  %v143 = vunpack.c.h.b16 %v18
  %v144 = vunpack.c.l.b16 %v19
  %v145 = vunpack.c.h.b16 %v19
  %v146 = vunpack.c.l.b16 %v20
  %v147 = vunpack.c.h.b16 %v20
  %v148 = vunpack.c.l.b16 %v21
  %v149 = vunpack.c.h.b16 %v21
  %v150 = vunpack.c.l.b16 %v22
  %v151 = vunpack.c.h.b16 %v22
  %v152 = vunpack.c.l.b16 %v23
  %v153 = vunpack.c.h.b16 %v23
  %v154 = vunpack.c.l.b16 %v24
  %v155 = vunpack.c.h.b16 %v24
  %v156 = vunpack.c.l.b16 %v25
  %v157 = vunpack.c.h.b16 %v25
  %v158 = vunpack.c.l.b16 %v26
  %v159 = vunpack.c.h.b16 %v26
  %v160 = vunpack.c.l.b16 %v27
  %v161 = vunpack.c.h.b16 %v27
  %v162 = vunpack.c.l.b16 %v28
  %v163 = vunpack.c.h.b16 %v28
  %v164 = vunpack.c.l.b16 %v29
  %v165 = vunpack.c.h.b16 %v29
  %v166 = vunpack.c.l.b16 %v30
  %v167 = vunpack.c.h.b16 %v30
  %v168 = vunpack.c.l.b16 %v31
  %v169 = vunpack.c.h.b16 %v31
  %v170 = vunpack.c.l.b16 %v32
  %v171 = vunpack.c.h.b16 %v32
  %v172 = vunpack.c.l.b16 %v33
  %v173 = vunpack.c.h.b16 %v33
  %v174 = vunpack.c.l.b16 %v34
  %v175 = vunpack.c.h.b16 %v34
  %v176 = vunpack.c.l.b16 %v35
  %v177 = vunpack.c.h.b16 %v35
  %v178 = vunpack.c.l.b16 %v36
  %v179 = vunpack.c.h.b16 %v36
  %v180 = vunpack.c.l.b16 %v37
  %v181 = vunpack.c.h.b16 %v37
  %v182 = vunpack.c.l.b16 %v38
  %v183 = vunpack.c.h.b16 %v38
  %v184 = vunpack.c.l.b16 %v39
  %v185 = vunpack.c.h.b16 %v39
  %v186 = vpack.c.b16 %v138, %v134
  %v187 = vpack.c.b16 %v139, %v135
  %v188 = vpack.c.b16 %v140, %v136
  %v189 = vpack.c.b16 %v141, %v137
  %v190 = vpack.c.b16 %v146, %v142
  %v191 = vpack.c.b16 %v147, %v143
  %v192 = vpack.c.b16 %v148, %v144
  %v193 = vpack.c.b16 %v149, %v145
  %v194 = vpack.c.b16 %v154, %v150
  %v195 = vpack.c.b16 %v155, %v151
  %v196 = vpack.c.b16 %v156, %v152
  %v197 = vpack.c.b16 %v157, %v153
  %v198 = vpack.c.b16 %v162, %v158
  %v199 = vpack.c.b16 %v163, %v159
  %v200 = vpack.c.b16 %v164, %v160
  %v201 = vpack.c.b16 %v165, %v161
  %v202 = vpack.c.b16 %v170, %v166
  %v203 = vpack.c.b16 %v171, %v167
  %v204 = vpack.c.b16 %v172, %v168
  %v205 = vpack.c.b16 %v173, %v169
  %v206 = vpack.c.b16 %v178, %v174
  %v207 = vpack.c.b16 %v179, %v175
  %v208 = vpack.c.b16 %v180, %v176
  %v209 = vpack.c.b16 %v181, %v177
  %v210 = vpack.c.b16 %v182, %v182
  %v211 = vpack.c.b16 %v183, %v183
  %v212 = vpack.c.b16 %v184, %v184
  %v213 = vpack.c.b16 %v185, %v185
  %v306 = vunpack.c.l.b16 %v40
  %v307 = vunpack.c.l.b16 %v41
  %v308 = vunpack.c.l.b16 %v42
  %v309 = vunpack.c.l.b16 %v43
  %v310 = vunpack.c.l.b16 %v44
  %v311 = vunpack.c.l.b16 %v45
  %v312 = vunpack.c.l.b16 %v46
  %v313 = vunpack.c.l.b16 %v47
  %v314 = vunpack.c.l.b16 %v48
  %v315 = vunpack.c.l.b16 %v49
  %v316 = vunpack.c.l.b16 %v50
  %v317 = vunpack.c.l.b16 %v51
  %v318 = vunpack.c.l.b16 %v52
  %v319 = vunpack.c.l.b16 %v53
  %v320 = vunpack.c.l.b16 %v54
  %v321 = vunpack.c.l.b16 %v55
  %v322 = vunpack.c.l.b16 %v56
  %v323 = vunpack.c.l.b16 %v57
  %v324 = vunpack.c.l.b16 %v58
  %v325 = vunpack.c.l.b16 %v59
  %v326 = vunpack.c.l.b16 %v60
  %v327 = vunpack.c.l.b16 %v61
  %v328 = vunpack.c.l.b16 %v62
  %v329 = vunpack.c.l.b16 %v63
  %v330 = vunpack.c.l.b16 %v64
  %v331 = vunpack.c.l.b16 %v65
  %v332 = vunpack.c.l.b16 %v66
  %v333 = vunpack.c.l.b16 %v67
  %v334 = vunpack.c.l.b16 %v68
  %v335 = vunpack.c.l.b16 %v69
  %v336 = vunpack.c.l.b16 %v70
  %v337 = vunpack.c.l.b16 %v71
  %v338 = vunpack.c.l.b16 %v72
  %v339 = vunpack.c.l.b16 %v73
  %v340 = vunpack.c.l.b16 %v74
  %v341 = vunpack.c.l.b16 %v75
  %v342 = vunpack.c.l.b16 %v76
  %v343 = vunpack.c.l.b16 %v77
  %v344 = vunpack.c.l.b16 %v78
  %v345 = vunpack.c.l.b16 %v79
  %v346 = vunpack.c.l.b16 %v80
  %v347 = vunpack.c.l.b16 %v81
  %v348 = vunpack.c.l.b16 %v82
  %v349 = vunpack.c.l.b16 %v83
  %v350 = vunpack.c.l.b16 %v84
  %v351 = vunpack.c.l.b16 %v85
  %v352 = vunpack.c.l.b16 %v86
  %v353 = vunpack.c.l.b16 %v87
  %v354 = vunpack.c.l.b16 %v88
  %v355 = vunpack.c.l.b16 %v89
  %v356 = vunpack.c.l.b16 %v90
  %v357 = vunpack.c.l.b16 %v91
  %v358 = vunpack.c.l.b16 %v92
  %v359 = vunpack.c.l.b16 %v93
  %v360 = vunpack.c.l.b16 %v94
  %v361 = vunpack.c.l.b16 %v95
  %v362 = vunpack.c.l.b16 %v96
  %v363 = vunpack.c.l.b16 %v97
  %v364 = vunpack.c.l.b16 %v98
  %v365 = vunpack.c.l.b16 %v99
  %v366 = vunpack.c.l.b16 %v100
  %v367 = vunpack.c.l.b16 %v101
  %v368 = vunpack.c.l.b16 %v102
  %v369 = vunpack.c.l.b16 %v103
  %v370 = vpack.c.b16 %v307, %v306
  %v371 = vpack.c.b16 %v309, %v308
  %v372 = vpack.c.b16 %v311, %v310
  %v373 = vpack.c.b16 %v313, %v312
  %v374 = vpack.c.b16 %v315, %v314
  %v375 = vpack.c.b16 %v317, %v316
  %v376 = vpack.c.b16 %v319, %v318
  %v377 = vpack.c.b16 %v321, %v320
  %v378 = vpack.c.b16 %v323, %v322
  %v379 = vpack.c.b16 %v325, %v324
  %v380 = vpack.c.b16 %v327, %v326
  %v381 = vpack.c.b16 %v329, %v328
  %v382 = vpack.c.b16 %v331, %v330
  %v383 = vpack.c.b16 %v333, %v332
  %v384 = vpack.c.b16 %v335, %v334
  %v385 = vpack.c.b16 %v337, %v336
  %v386 = vpack.c.b16 %v339, %v338
  %v387 = vpack.c.b16 %v341, %v340
  %v388 = vpack.c.b16 %v343, %v342
  %v389 = vpack.c.b16 %v345, %v344
  %v390 = vpack.c.b16 %v347, %v346
  %v391 = vpack.c.b16 %v349, %v348
  %v392 = vpack.c.b16 %v351, %v350
  %v393 = vpack.c.b16 %v353, %v352
  %v394 = vpack.c.b16 %v355, %v354
  %v395 = vpack.c.b16 %v357, %v356
  %v396 = vpack.c.b16 %v359, %v358
  %v397 = vpack.c.b16 %v361, %v360
  %v398 = vpack.c.b16 %v363, %v362
  %v399 = vpack.c.b16 %v365, %v364
  %v400 = vpack.c.b16 %v367, %v366
  %v401 = vpack.c.b16 %v369, %v368
  %434 = vmatpush.bf16.msra.mxu0 %v377
  %435 = vmatpush.bf16.msra.mxu0 %v376
  %436 = vmatpush.bf16.msra.mxu0 %v375
  %437 = vmatpush.bf16.msra.mxu0 %v374
  %438 = vmatpush.bf16.msra.mxu0 %v373
  %439 = vmatpush.bf16.msra.mxu0 %v372
  %440 = vmatpush.bf16.msra.mxu0 %v371
  %441 = vmatpush.bf16.msra.mxu0 %v370
  %442 = vmatmul.bf16.gmra.mxu0 %v186
  %v443 = vpop.f32.mrf.mxu0
  %v444 = vadd.f32 %v106, %v443
  %v445 = vpop.f32.mrf.mxu0
  %v446 = vadd.f32 %v106, %v445
  %447 = vmatmul.bf16.gmra.mxu0 %v190
  %v448 = vpop.f32.mrf.mxu0
  %v449 = vadd.f32 %v106, %v448
  %v450 = vpop.f32.mrf.mxu0
  %v451 = vadd.f32 %v106, %v450
  %452 = vmatmul.bf16.gmra.mxu0 %v194
  %v453 = vpop.f32.mrf.mxu0
  %v454 = vadd.f32 %v106, %v453
  %v455 = vpop.f32.mrf.mxu0
  %v456 = vadd.f32 %v106, %v455
  %457 = vmatmul.bf16.gmra.mxu0 %v198
  %v458 = vpop.f32.mrf.mxu0
  %v459 = vadd.f32 %v106, %v458
  %v460 = vpop.f32.mrf.mxu0
  %v461 = vadd.f32 %v106, %v460
  %462 = vmatmul.bf16.gmra.mxu0 %v202
  %v463 = vpop.f32.mrf.mxu0
  %v464 = vadd.f32 %v106, %v463
  %v465 = vpop.f32.mrf.mxu0
  %v466 = vadd.f32 %v106, %v465
  %467 = vmatmul.bf16.gmra.mxu0 %v206
  %v468 = vpop.f32.mrf.mxu0
  %v469 = vadd.f32 %v106, %v468
  %v470 = vpop.f32.mrf.mxu0
  %v471 = vadd.f32 %v106, %v470
  %472 = vmatmul.bf16.gmra.mxu0 %v210
  %v473 = vpop.f32.mrf.mxu0
  %v474 = vadd.f32 %v106, %v473
  %v475 = vpop.f32.mrf.mxu0
  %476 = vdwg.mxu0
  %477 = vmatpush.bf16.msra.mxu0 %v385
  %478 = vmatpush.bf16.msra.mxu0 %v384
  %479 = vmatpush.bf16.msra.mxu0 %v383
  %480 = vmatpush.bf16.msra.mxu0 %v382
  %481 = vmatpush.bf16.msra.mxu0 %v381
  %482 = vmatpush.bf16.msra.mxu0 %v380
  %483 = vmatpush.bf16.msra.mxu0 %v379
  %484 = vmatpush.bf16.msra.mxu0 %v378
  %485 = vmatmul.bf16.gmra.mxu0 %v187
  %v486 = vpop.f32.mrf.mxu0
  %v487 = vadd.f32 %v444, %v486
  %v488 = vpop.f32.mrf.mxu0
  %v489 = vadd.f32 %v446, %v488
  %490 = vmatmul.bf16.gmra.mxu0 %v191
  %v491 = vpop.f32.mrf.mxu0
  %v492 = vadd.f32 %v449, %v491
  %v493 = vpop.f32.mrf.mxu0
  %v494 = vadd.f32 %v451, %v493
  %495 = vmatmul.bf16.gmra.mxu0 %v195
  %v496 = vpop.f32.mrf.mxu0
  %v497 = vadd.f32 %v454, %v496
  %v498 = vpop.f32.mrf.mxu0
  %v499 = vadd.f32 %v456, %v498
  %500 = vmatmul.bf16.gmra.mxu0 %v199
  %v501 = vpop.f32.mrf.mxu0
  %v502 = vadd.f32 %v459, %v501
  %v503 = vpop.f32.mrf.mxu0
  %v504 = vadd.f32 %v461, %v503
  %505 = vmatmul.bf16.gmra.mxu0 %v203
  %v506 = vpop.f32.mrf.mxu0
  %v507 = vadd.f32 %v464, %v506
  %v508 = vpop.f32.mrf.mxu0
  %v509 = vadd.f32 %v466, %v508
  %510 = vmatmul.bf16.gmra.mxu0 %v207
  %v511 = vpop.f32.mrf.mxu0
  %v512 = vadd.f32 %v469, %v511
  %v513 = vpop.f32.mrf.mxu0
  %v514 = vadd.f32 %v471, %v513
  %515 = vmatmul.bf16.gmra.mxu0 %v211
  %v516 = vpop.f32.mrf.mxu0
  %v517 = vadd.f32 %v474, %v516
  %v518 = vpop.f32.mrf.mxu0
  %519 = vdwg.mxu0
  %520 = vmatpush.bf16.msra.mxu0 %v393
  %521 = vmatpush.bf16.msra.mxu0 %v392
  %522 = vmatpush.bf16.msra.mxu0 %v391
  %523 = vmatpush.bf16.msra.mxu0 %v390
  %524 = vmatpush.bf16.msra.mxu0 %v389
  %525 = vmatpush.bf16.msra.mxu0 %v388
  %526 = vmatpush.bf16.msra.mxu0 %v387
  %527 = vmatpush.bf16.msra.mxu0 %v386
  %528 = vmatmul.bf16.gmra.mxu0 %v188
  %v529 = vpop.f32.mrf.mxu0
  %v530 = vadd.f32 %v487, %v529
  %v531 = vpop.f32.mrf.mxu0
  %v532 = vadd.f32 %v489, %v531
  %533 = vmatmul.bf16.gmra.mxu0 %v192
  %v534 = vpop.f32.mrf.mxu0
  %v535 = vadd.f32 %v492, %v534
  %v536 = vpop.f32.mrf.mxu0
  %v537 = vadd.f32 %v494, %v536
  %538 = vmatmul.bf16.gmra.mxu0 %v196
  %v539 = vpop.f32.mrf.mxu0
  %v540 = vadd.f32 %v497, %v539
  %v541 = vpop.f32.mrf.mxu0
  %v542 = vadd.f32 %v499, %v541
  %543 = vmatmul.bf16.gmra.mxu0 %v200
  %v544 = vpop.f32.mrf.mxu0
  %v545 = vadd.f32 %v502, %v544
  %v546 = vpop.f32.mrf.mxu0
  %v547 = vadd.f32 %v504, %v546
  %548 = vmatmul.bf16.gmra.mxu0 %v204
  %v549 = vpop.f32.mrf.mxu0
  %v550 = vadd.f32 %v507, %v549
  %v551 = vpop.f32.mrf.mxu0
  %v552 = vadd.f32 %v509, %v551
  %553 = vmatmul.bf16.gmra.mxu0 %v208
  %v554 = vpop.f32.mrf.mxu0
  %v555 = vadd.f32 %v512, %v554
  %v556 = vpop.f32.mrf.mxu0
  %v557 = vadd.f32 %v514, %v556
  %558 = vmatmul.bf16.gmra.mxu0 %v212
  %v559 = vpop.f32.mrf.mxu0
  %v560 = vadd.f32 %v517, %v559
  %v561 = vpop.f32.mrf.mxu0
  %562 = vdwg.mxu0
  %563 = vmatpush.bf16.msra.mxu0 %v401
  %564 = vmatpush.bf16.msra.mxu0 %v400
  %565 = vmatpush.bf16.msra.mxu0 %v399
  %566 = vmatpush.bf16.msra.mxu0 %v398
  %567 = vmatpush.bf16.msra.mxu0 %v397
  %568 = vmatpush.bf16.msra.mxu0 %v396
  %569 = vmatpush.bf16.msra.mxu0 %v395
  %570 = vmatpush.bf16.msra.mxu0 %v394
  %571 = vmatmul.bf16.gmra.mxu0 %v189
  %v572 = vpop.f32.mrf.mxu0
  %v573 = vadd.f32 %v530, %v572
  %v574 = vpop.f32.mrf.mxu0
  %v575 = vadd.f32 %v532, %v574
  %576 = vmatmul.bf16.gmra.mxu0 %v193
  %v577 = vpop.f32.mrf.mxu0
  %v578 = vadd.f32 %v535, %v577
  %v579 = vpop.f32.mrf.mxu0
  %v580 = vadd.f32 %v537, %v579
  %581 = vmatmul.bf16.gmra.mxu0 %v197
  %v582 = vpop.f32.mrf.mxu0
  %v583 = vadd.f32 %v540, %v582
  %v584 = vpop.f32.mrf.mxu0
  %v585 = vadd.f32 %v542, %v584
  %586 = vmatmul.bf16.gmra.mxu0 %v201
  %v587 = vpop.f32.mrf.mxu0
  %v588 = vadd.f32 %v545, %v587
  %v589 = vpop.f32.mrf.mxu0
  %v590 = vadd.f32 %v547, %v589
  %591 = vmatmul.bf16.gmra.mxu0 %v205
  %v592 = vpop.f32.mrf.mxu0
  %v593 = vadd.f32 %v550, %v592
  %v594 = vpop.f32.mrf.mxu0
  %v595 = vadd.f32 %v552, %v594
  %596 = vmatmul.bf16.gmra.mxu0 %v209
  %v597 = vpop.f32.mrf.mxu0
  %v598 = vadd.f32 %v555, %v597
  %v599 = vpop.f32.mrf.mxu0
  %v600 = vadd.f32 %v557, %v599
  %601 = vmatmul.bf16.gmra.mxu0 %v213
  %v602 = vpop.f32.mrf.mxu0
  %v603 = vadd.f32 %v560, %v602
  %v604 = vpop.f32.mrf.mxu0
  %605 = vdwg.mxu0
  %v606 = vmax.f32 %v573, 0.0
  %v607 = vmax.f32 %v575, 0.0
  %v608 = vmax.f32 %v578, 0.0
  %v609 = vmax.f32 %v580, 0.0
  %v610 = vmax.f32 %v583, 0.0
  %v611 = vmax.f32 %v585, 0.0
  %v612 = vmax.f32 %v588, 0.0
  %v613 = vmax.f32 %v590, 0.0
  %v614 = vmax.f32 %v593, 0.0
  %v615 = vmax.f32 %v595, 0.0
  %v616 = vmax.f32 %v598, 0.0
  %v617 = vmax.f32 %v600, 0.0
  %v618 = vmax.f32 %v603, 0.0
  %v619 = vpack.c.bf16 %v606, %v606
  %v620 = vpack.c.bf16 %v607, %v607
  %v621 = vpack.c.bf16 %v608, %v608
  %v622 = vpack.c.bf16 %v609, %v609
  %v623 = vpack.c.bf16 %v610, %v610
  %v624 = vpack.c.bf16 %v611, %v611
  %v625 = vpack.c.bf16 %v612, %v612
  %v626 = vpack.c.bf16 %v613, %v613
  %v627 = vpack.c.bf16 %v614, %v614
  %v628 = vpack.c.bf16 %v615, %v615
  %v629 = vpack.c.bf16 %v616, %v616
  %v630 = vpack.c.bf16 %v617, %v617
  %v631 = vpack.c.bf16 %v618, %v618
  %vm632 = vcmask 257024
  %633 = vst.msk [vmem:[%s3] sm:$0xf] %vm632, %v619
  %634 = vst.msk [vmem:[%s3 + $0x4] sm:$0xf] %vm632, %v620
  %635 = vst.msk [vmem:[%s3 + $0x8] sm:$0xf] %vm632, %v621
  %636 = vst.msk [vmem:[%s3 + $0xc] sm:$0xf] %vm632, %v622
  %637 = vst.msk [vmem:[%s3 + $0x10] sm:$0xf] %vm632, %v623
  %638 = vst.msk [vmem:[%s3 + $0x14] sm:$0xf] %vm632, %v624
  %639 = vst.msk [vmem:[%s3 + $0x18] sm:$0xf] %vm632, %v625
  %640 = vst.msk [vmem:[%s3 + $0x1c] sm:$0xf] %vm632, %v626
  %641 = vst.msk [vmem:[%s3 + $0x20] sm:$0xf] %vm632, %v627
  %642 = vst.msk [vmem:[%s3 + $0x24] sm:$0xf] %vm632, %v628
  %643 = vst.msk [vmem:[%s3 + $0x28] sm:$0xf] %vm632, %v629
  %644 = vst.msk [vmem:[%s3 + $0x2c] sm:$0xf] %vm632, %v630
  %vm645 = vcmask 253952
  %646 = vst.msk [vmem:[%s3 + $0x30] sm:$0x1] %vm645, %v631
  // Predicated region
  $region14: #{dqn_forward.5} parent=0 // pred_check
    _
  $region15: #{dqn_forward.5} parent=0 // pred_check_branch
    %648 = sbr.rel (0) target = $region17
  $region16: #{dqn_forward.5} parent=0 // pred_region
    _
  $region17: #{dqn_forward.5} parent=0 // pred_fallthru
    _
  // Predicated region
  $region18: #{dqn_forward.5} parent=0 // pred_check
    _
  $region19: #{dqn_forward.5} parent=0 // pred_check_branch
    %650 = sbr.rel (0) target = $region21
  $region20: #{dqn_forward.5} parent=0 // pred_region
    _
  $region21: #{dqn_forward.5} parent=0 // pred_fallthru
    _

// kernel: dqn_forward.7
$region0: #{dqn_forward.7}
  #allocation0 [shape = 'u32[]', space=smem, size = 0x4, offset = 0x4, fixed_abs, tag = 'smem constant byte address 0x4 - core index']
  #allocation1 [shape = 'u32[72,128]{1,0:T(1,128)}', space=vmem, size = 0x9000, scoped, tag = 'internal scratch']
  %s0 = inlined_call_operand.vmem [shape: bf16[2,128], index: 0, kind: input, shape index: {}]
  %s1 = inlined_call_operand.vmem [shape: bf16[128,128], index: 1, kind: input, shape index: {}]
  %s2 = inlined_call_operand.vmem [shape: f32[1,128], index: 2, kind: input, shape index: {}]
  %s3 = inlined_call_operand.hbm [shape: f32[2,128], index: 3, kind: output, shape index: {}]
  %s4 = sld [smem:[#allocation0]]
  $region22: #{dqn_forward.7} parent=0
    _
  %s6 = ssub.s32 1, %s4
  %s7 = scalar_select 0, %s6, %s4
  $region1: #{dqn_forward.7} parent=0
    #allocation2 [shape = 'u8[1024]{0}', space=vmem, size = 0x400, scoped, tag = 'output window, operand 0, single buffered']
    #allocation3 [shape = 's32[1]{0}', space=sflag, size = 0x4, scoped, tag = 'scoped memory for dqn_forward.7']
    %8 = vsyncpa [#allocation3], 0
    // Predicated region
    $region2: #{dqn_forward.7} parent=1 // pred_check
      _
    $region3: #{dqn_forward.7} parent=1 // pred_check_branch
      %10 = sbr.rel (0) target = $region5
    $region4: #{dqn_forward.7} parent=1 // pred_region
      _
    $region5: #{dqn_forward.7} parent=1 // pred_fallthru
      _
    // Predicated region
    $region6: #{dqn_forward.7} parent=1 // pred_check
      _
    $region7: #{dqn_forward.7} parent=1 // pred_check_branch
      %12 = sbr.rel (0) target = $region9
    $region8: #{dqn_forward.7} parent=1 // pred_region
      _
    $region9: #{dqn_forward.7} parent=1 // pred_fallthru
      _
    // Predicated region
    $region10: #{dqn_forward.7} parent=1 // pred_check
      _
    $region11: #{dqn_forward.7} parent=1 // pred_check_branch
      %14 = sbr.rel (0) target = $region13
    $region12: #{dqn_forward.7} parent=1 // pred_region
      _
    $region13: #{dqn_forward.7} parent=1 // pred_fallthru
      _
    %v15 = vld [vmem:[%s0] sm:$0x1]
    %v16 = vld [vmem:[%s1] sm:$0xf]
    %v17 = vld [vmem:[%s1 + $0x4] sm:$0xf]
    %v18 = vld [vmem:[%s1 + $0x8] sm:$0xf]
    %v19 = vld [vmem:[%s1 + $0xc] sm:$0xf]
    %v20 = vld [vmem:[%s1 + $0x10] sm:$0xf]
    %v21 = vld [vmem:[%s1 + $0x14] sm:$0xf]
    %v22 = vld [vmem:[%s1 + $0x18] sm:$0xf]
    %v23 = vld [vmem:[%s1 + $0x1c] sm:$0xf]
    %v24 = vld [vmem:[%s1 + $0x20] sm:$0xf]
    %v25 = vld [vmem:[%s1 + $0x24] sm:$0xf]
    %v26 = vld [vmem:[%s1 + $0x28] sm:$0xf]
    %v27 = vld [vmem:[%s1 + $0x2c] sm:$0xf]
    %v28 = vld [vmem:[%s1 + $0x30] sm:$0xf]
    %v29 = vld [vmem:[%s1 + $0x34] sm:$0xf]
    %v30 = vld [vmem:[%s1 + $0x38] sm:$0xf]
    %v31 = vld [vmem:[%s1 + $0x3c] sm:$0xf]
    %v32 = vld [vmem:[%s2] sm:$0x1]
    %v34 = vperm.slane %v32, 0
    %v52 = vunpack.c.l.b16 %v16
    %v53 = vunpack.c.l.b16 %v17
    %v54 = vunpack.c.l.b16 %v18
    %v55 = vunpack.c.l.b16 %v19
    %v56 = vunpack.c.l.b16 %v20
    %v57 = vunpack.c.l.b16 %v21
    %v58 = vunpack.c.l.b16 %v22
    %v59 = vunpack.c.l.b16 %v23
    %v60 = vunpack.c.l.b16 %v24
    %v61 = vunpack.c.l.b16 %v25
    %v62 = vunpack.c.l.b16 %v26
    %v63 = vunpack.c.l.b16 %v27
    %v64 = vunpack.c.l.b16 %v28
    %v65 = vunpack.c.l.b16 %v29
    %v66 = vunpack.c.l.b16 %v30
    %v67 = vunpack.c.l.b16 %v31
    %v68 = vpack.c.b16 %v53, %v52
    %v69 = vpack.c.b16 %v55, %v54
    %v70 = vpack.c.b16 %v57, %v56
    %v71 = vpack.c.b16 %v59, %v58
    %v72 = vpack.c.b16 %v61, %v60
    %v73 = vpack.c.b16 %v63, %v62
    %v74 = vpack.c.b16 %v65, %v64
    %v75 = vpack.c.b16 %v67, %v66
    %84 = vmatpush.bf16.msra.mxu0 %v75
    %85 = vmatpush.bf16.msra.mxu0 %v74
    %86 = vmatpush.bf16.msra.mxu0 %v73
    %87 = vmatpush.bf16.msra.mxu0 %v72
    %88 = vmatpush.bf16.msra.mxu0 %v71
    %89 = vmatpush.bf16.msra.mxu0 %v70
    %90 = vmatpush.bf16.msra.mxu0 %v69
    %91 = vmatpush.bf16.msra.mxu0 %v68
    %92 = vmatmul.bf16.gmra.mxu0 %v15
    %v93 = vpop.f32.mrf.mxu0
    %v94 = vadd.f32 %v34, %v93
    %v95 = vpop.f32.mrf.mxu0
    %96 = vdwg.mxu0
    %97 = vst [vmem:[#allocation2] sm:$0x3] %v94
    // Predicated region
    $region14: #{dqn_forward.7} parent=1 // pred_check
      _
    $region15: #{dqn_forward.7} parent=1 // pred_check_branch
      %99 = sbr.rel (0) target = $region17
    $region16: #{dqn_forward.7} parent=1 // pred_region
      %101 = vsyncadd [#allocation3], 0
      %s103 = sshll.u32 [#allocation2], 4
      %s104 = int_to_ptr.vmem [resolvable:$true] %s103
      %s105 = sshll.u32 %s3, 4
      %s106 = int_to_ptr.hbm [resolvable:$true] %s105
      %108 = dma.vmem_to_hbm [thread:$0]  %s104, 32, %s106, [#allocation3]
    $region17: #{dqn_forward.7} parent=1 // pred_fallthru
      _
    // Predicated region
    $region18: #{dqn_forward.7} parent=1 // pred_check
      _
    $region19: #{dqn_forward.7} parent=1 // pred_check_branch
      %110 = sbr.rel (0) target = $region21
    $region20: #{dqn_forward.7} parent=1 // pred_region
      %112 = dma.done [#allocation3], 32
    $region21: #{dqn_forward.7} parent=1 // pred_fallthru
      _
    %113 = vsyncpa [#allocation3], 1

// kernel: dqn_forward.6
$region0: #{dqn_forward.6}
  #allocation0 [shape = 'u32[]', space=smem, size = 0x4, offset = 0x4, fixed_abs, tag = 'smem constant byte address 0x4 - core index']
  #allocation1 [shape = 'u32[72,128]{1,0:T(1,128)}', space=vmem, size = 0x9000, scoped, tag = 'internal scratch']
  %s0 = inlined_call_operand.vmem [shape: bf16[8,896], index: 0, kind: input, shape index: {}]
  %s1 = inlined_call_operand.vmem [shape: bf16[896,32], index: 1, kind: input, shape index: {}]
  %s2 = inlined_call_operand.vmem [shape: f32[1,32], index: 2, kind: input, shape index: {}]
  %s3 = inlined_call_operand.vmem [shape: bf16[8,32], index: 3, kind: output, shape index: {}]
  %s4 = sld [smem:[#allocation0]]
  $region22: #{dqn_forward.6} parent=0
    _
  %s6 = ssub.s32 1, %s4
  %s7 = scalar_select 0, %s6, %s4
  // Predicated region
  $region2: #{dqn_forward.6} parent=0 // pred_check
    _
  $region3: #{dqn_forward.6} parent=0 // pred_check_branch
    %9 = sbr.rel (0) target = $region5
  $region4: #{dqn_forward.6} parent=0 // pred_region
    _
  $region5: #{dqn_forward.6} parent=0 // pred_fallthru
    _
  // Predicated region
  $region6: #{dqn_forward.6} parent=0 // pred_check
    _
  $region7: #{dqn_forward.6} parent=0 // pred_check_branch
    %11 = sbr.rel (0) target = $region9
  $region8: #{dqn_forward.6} parent=0 // pred_region
    _
  $region9: #{dqn_forward.6} parent=0 // pred_fallthru
    _
  // Predicated region
  $region10: #{dqn_forward.6} parent=0 // pred_check
    _
  $region11: #{dqn_forward.6} parent=0 // pred_check_branch
    %13 = sbr.rel (0) target = $region13
  $region12: #{dqn_forward.6} parent=0 // pred_region
    _
  $region13: #{dqn_forward.6} parent=0 // pred_fallthru
    _
  %v14 = vld [vmem:[%s0] sm:$0xff]
  %v15 = vld [vmem:[%s0 + $0x8] sm:$0xff]
  %v16 = vld [vmem:[%s0 + $0x10] sm:$0xff]
  %v17 = vld [vmem:[%s0 + $0x18] sm:$0xf]
  %v18 = vld [vmem:[%s1] sm:$0xf]
  %v19 = vld [vmem:[%s1 + $0x4] sm:$0xf]
  %v20 = vld [vmem:[%s1 + $0x8] sm:$0xf]
  %v21 = vld [vmem:[%s1 + $0xc] sm:$0xf]
  %v22 = vld [vmem:[%s1 + $0x10] sm:$0xf]
  %v23 = vld [vmem:[%s1 + $0x14] sm:$0xf]
  %v24 = vld [vmem:[%s1 + $0x18] sm:$0xf]
  %v25 = vld [vmem:[%s1 + $0x1c] sm:$0xf]
  %v26 = vld [vmem:[%s1 + $0x20] sm:$0xf]
  %v27 = vld [vmem:[%s1 + $0x24] sm:$0xf]
  %v28 = vld [vmem:[%s1 + $0x28] sm:$0xf]
  %v29 = vld [vmem:[%s1 + $0x2c] sm:$0xf]
  %v30 = vld [vmem:[%s1 + $0x30] sm:$0xf]
  %v31 = vld [vmem:[%s1 + $0x34] sm:$0xf]
  %v32 = vld [vmem:[%s1 + $0x38] sm:$0xf]
  %v33 = vld [vmem:[%s1 + $0x3c] sm:$0xf]
  %v34 = vld [vmem:[%s1 + $0x40] sm:$0xf]
  %v35 = vld [vmem:[%s1 + $0x44] sm:$0xf]
  %v36 = vld [vmem:[%s1 + $0x48] sm:$0xf]
  %v37 = vld [vmem:[%s1 + $0x4c] sm:$0xf]
  %v38 = vld [vmem:[%s1 + $0x50] sm:$0xf]
  %v39 = vld [vmem:[%s1 + $0x54] sm:$0xf]
  %v40 = vld [vmem:[%s1 + $0x58] sm:$0xf]
  %v41 = vld [vmem:[%s1 + $0x5c] sm:$0xf]
  %v42 = vld [vmem:[%s1 + $0x60] sm:$0xf]
  %v43 = vld [vmem:[%s1 + $0x64] sm:$0xf]
  %v44 = vld [vmem:[%s1 + $0x68] sm:$0xf]
  %v45 = vld [vmem:[%s1 + $0x6c] sm:$0xf]
  %v46 = vld [vmem:[%s1 + $0x70] sm:$0xf]
  %v47 = vld [vmem:[%s1 + $0x74] sm:$0xf]
  %v48 = vld [vmem:[%s1 + $0x78] sm:$0xf]
  %v49 = vld [vmem:[%s1 + $0x7c] sm:$0xf]
  %v50 = vld [vmem:[%s1 + $0x80] sm:$0xf]
  %v51 = vld [vmem:[%s1 + $0x84] sm:$0xf]
  %v52 = vld [vmem:[%s1 + $0x88] sm:$0xf]
  %v53 = vld [vmem:[%s1 + $0x8c] sm:$0xf]
  %v54 = vld [vmem:[%s1 + $0x90] sm:$0xf]
  %v55 = vld [vmem:[%s1 + $0x94] sm:$0xf]
  %v56 = vld [vmem:[%s1 + $0x98] sm:$0xf]
  %v57 = vld [vmem:[%s1 + $0x9c] sm:$0xf]
  %v58 = vld [vmem:[%s1 + $0xa0] sm:$0xf]
  %v59 = vld [vmem:[%s1 + $0xa4] sm:$0xf]
  %v60 = vld [vmem:[%s1 + $0xa8] sm:$0xf]
  %v61 = vld [vmem:[%s1 + $0xac] sm:$0xf]
  %v62 = vld [vmem:[%s1 + $0xb0] sm:$0xf]
  %v63 = vld [vmem:[%s1 + $0xb4] sm:$0xf]
  %v64 = vld [vmem:[%s1 + $0xb8] sm:$0xf]
  %v65 = vld [vmem:[%s1 + $0xbc] sm:$0xf]
  %v66 = vld [vmem:[%s1 + $0xc0] sm:$0xf]
  %v67 = vld [vmem:[%s1 + $0xc4] sm:$0xf]
  %v68 = vld [vmem:[%s1 + $0xc8] sm:$0xf]
  %v69 = vld [vmem:[%s1 + $0xcc] sm:$0xf]
  %v70 = vld [vmem:[%s1 + $0xd0] sm:$0xf]
  %v71 = vld [vmem:[%s1 + $0xd4] sm:$0xf]
  %v72 = vld [vmem:[%s1 + $0xd8] sm:$0xf]
  %v73 = vld [vmem:[%s1 + $0xdc] sm:$0xf]
  %v74 = vld [vmem:[%s1 + $0xe0] sm:$0xf]
  %v75 = vld [vmem:[%s1 + $0xe4] sm:$0xf]
  %v76 = vld [vmem:[%s1 + $0xe8] sm:$0xf]
  %v77 = vld [vmem:[%s1 + $0xec] sm:$0xf]
  %v78 = vld [vmem:[%s1 + $0xf0] sm:$0xf]
  %v79 = vld [vmem:[%s1 + $0xf4] sm:$0xf]
  %v80 = vld [vmem:[%s1 + $0xf8] sm:$0xf]
  %v81 = vld [vmem:[%s1 + $0xfc] sm:$0xf]
  %v82 = vld [vmem:[%s1 + $0x100] sm:$0xf]
  %v83 = vld [vmem:[%s1 + $0x104] sm:$0xf]
  %v84 = vld [vmem:[%s1 + $0x108] sm:$0xf]
  %v85 = vld [vmem:[%s1 + $0x10c] sm:$0xf]
  %v86 = vld [vmem:[%s1 + $0x110] sm:$0xf]
  %v87 = vld [vmem:[%s1 + $0x114] sm:$0xf]
  %v88 = vld [vmem:[%s1 + $0x118] sm:$0xf]
  %v89 = vld [vmem:[%s1 + $0x11c] sm:$0xf]
  %v90 = vld [vmem:[%s1 + $0x120] sm:$0xf]
  %v91 = vld [vmem:[%s1 + $0x124] sm:$0xf]
  %v92 = vld [vmem:[%s1 + $0x128] sm:$0xf]
  %v93 = vld [vmem:[%s1 + $0x12c] sm:$0xf]
  %v94 = vld [vmem:[%s1 + $0x130] sm:$0xf]
  %v95 = vld [vmem:[%s1 + $0x134] sm:$0xf]
  %v96 = vld [vmem:[%s1 + $0x138] sm:$0xf]
  %v97 = vld [vmem:[%s1 + $0x13c] sm:$0xf]
  %v98 = vld [vmem:[%s1 + $0x140] sm:$0xf]
  %v99 = vld [vmem:[%s1 + $0x144] sm:$0xf]
  %v100 = vld [vmem:[%s1 + $0x148] sm:$0xf]
  %v101 = vld [vmem:[%s1 + $0x14c] sm:$0xf]
  %v102 = vld [vmem:[%s1 + $0x150] sm:$0xf]
  %v103 = vld [vmem:[%s1 + $0x154] sm:$0xf]
  %v104 = vld [vmem:[%s1 + $0x158] sm:$0xf]
  %v105 = vld [vmem:[%s1 + $0x15c] sm:$0xf]
  %v106 = vld [vmem:[%s1 + $0x160] sm:$0xf]
  %v107 = vld [vmem:[%s1 + $0x164] sm:$0xf]
  %v108 = vld [vmem:[%s1 + $0x168] sm:$0xf]
  %v109 = vld [vmem:[%s1 + $0x16c] sm:$0xf]
  %v110 = vld [vmem:[%s1 + $0x170] sm:$0xf]
  %v111 = vld [vmem:[%s1 + $0x174] sm:$0xf]
  %v112 = vld [vmem:[%s1 + $0x178] sm:$0xf]
  %v113 = vld [vmem:[%s1 + $0x17c] sm:$0xf]
  %v114 = vld [vmem:[%s1 + $0x180] sm:$0xf]
  %v115 = vld [vmem:[%s1 + $0x184] sm:$0xf]
  %v116 = vld [vmem:[%s1 + $0x188] sm:$0xf]
  %v117 = vld [vmem:[%s1 + $0x18c] sm:$0xf]
  %v118 = vld [vmem:[%s1 + $0x190] sm:$0xf]
  %v119 = vld [vmem:[%s1 + $0x194] sm:$0xf]
  %v120 = vld [vmem:[%s1 + $0x198] sm:$0xf]
  %v121 = vld [vmem:[%s1 + $0x19c] sm:$0xf]
  %v122 = vld [vmem:[%s1 + $0x1a0] sm:$0xf]
  %v123 = vld [vmem:[%s1 + $0x1a4] sm:$0xf]
  %v124 = vld [vmem:[%s1 + $0x1a8] sm:$0xf]
  %v125 = vld [vmem:[%s1 + $0x1ac] sm:$0xf]
  %v126 = vld [vmem:[%s1 + $0x1b0] sm:$0xf]
  %v127 = vld [vmem:[%s1 + $0x1b4] sm:$0xf]
  %v128 = vld [vmem:[%s1 + $0x1b8] sm:$0xf]
  %v129 = vld [vmem:[%s1 + $0x1bc] sm:$0xf]
  %v130 = vld [vmem:[%s2] sm:$0x1]
  %v132 = vperm.slane %v130, 0
  %v138 = vunpack.c.l.b16 %v14
  %v139 = vunpack.c.h.b16 %v14
  %v140 = vunpack.c.l.b16 %v15
  %v141 = vunpack.c.h.b16 %v15
  %v142 = vunpack.c.l.b16 %v16
  %v143 = vunpack.c.h.b16 %v16
  %v144 = vunpack.c.l.b16 %v17
  %v145 = vpack.c.b16 %v138, %v138
  %v146 = vpack.c.b16 %v139, %v139
  %v147 = vpack.c.b16 %v140, %v140
  %v148 = vpack.c.b16 %v141, %v141
  %v149 = vpack.c.b16 %v142, %v142
  %v150 = vpack.c.b16 %v143, %v143
  %v151 = vpack.c.b16 %v144, %v144
  %v271 = vunpack.c.l.b16 %v18
  %v272 = vunpack.c.l.b16 %v19
  %v273 = vunpack.c.l.b16 %v20
  %v274 = vunpack.c.l.b16 %v21
  %v275 = vunpack.c.l.b16 %v22
  %v276 = vunpack.c.l.b16 %v23
  %v277 = vunpack.c.l.b16 %v24
  %v278 = vunpack.c.l.b16 %v25
  %v279 = vunpack.c.l.b16 %v26
  %v280 = vunpack.c.l.b16 %v27
  %v281 = vunpack.c.l.b16 %v28
  %v282 = vunpack.c.l.b16 %v29
  %v283 = vunpack.c.l.b16 %v30
  %v284 = vunpack.c.l.b16 %v31
  %v285 = vunpack.c.l.b16 %v32
  %v286 = vunpack.c.l.b16 %v33
  %v287 = vunpack.c.l.b16 %v34
  %v288 = vunpack.c.l.b16 %v35
  %v289 = vunpack.c.l.b16 %v36
  %v290 = vunpack.c.l.b16 %v37
  %v291 = vunpack.c.l.b16 %v38
  %v292 = vunpack.c.l.b16 %v39
  %v293 = vunpack.c.l.b16 %v40
  %v294 = vunpack.c.l.b16 %v41
  %v295 = vunpack.c.l.b16 %v42
  %v296 = vunpack.c.l.b16 %v43
  %v297 = vunpack.c.l.b16 %v44
  %v298 = vunpack.c.l.b16 %v45
  %v299 = vunpack.c.l.b16 %v46
  %v300 = vunpack.c.l.b16 %v47
  %v301 = vunpack.c.l.b16 %v48
  %v302 = vunpack.c.l.b16 %v49
  %v303 = vunpack.c.l.b16 %v50
  %v304 = vunpack.c.l.b16 %v51
  %v305 = vunpack.c.l.b16 %v52
  %v306 = vunpack.c.l.b16 %v53
  %v307 = vunpack.c.l.b16 %v54
  %v308 = vunpack.c.l.b16 %v55
  %v309 = vunpack.c.l.b16 %v56
  %v310 = vunpack.c.l.b16 %v57
  %v311 = vunpack.c.l.b16 %v58
  %v312 = vunpack.c.l.b16 %v59
  %v313 = vunpack.c.l.b16 %v60
  %v314 = vunpack.c.l.b16 %v61
  %v315 = vunpack.c.l.b16 %v62
  %v316 = vunpack.c.l.b16 %v63
  %v317 = vunpack.c.l.b16 %v64
  %v318 = vunpack.c.l.b16 %v65
  %v319 = vunpack.c.l.b16 %v66
  %v320 = vunpack.c.l.b16 %v67
  %v321 = vunpack.c.l.b16 %v68
  %v322 = vunpack.c.l.b16 %v69
  %v323 = vunpack.c.l.b16 %v70
  %v324 = vunpack.c.l.b16 %v71
  %v325 = vunpack.c.l.b16 %v72
  %v326 = vunpack.c.l.b16 %v73
  %v327 = vunpack.c.l.b16 %v74
  %v328 = vunpack.c.l.b16 %v75
  %v329 = vunpack.c.l.b16 %v76
  %v330 = vunpack.c.l.b16 %v77
  %v331 = vunpack.c.l.b16 %v78
  %v332 = vunpack.c.l.b16 %v79
  %v333 = vunpack.c.l.b16 %v80
  %v334 = vunpack.c.l.b16 %v81
  %v335 = vunpack.c.l.b16 %v82
  %v336 = vunpack.c.l.b16 %v83
  %v337 = vunpack.c.l.b16 %v84
  %v338 = vunpack.c.l.b16 %v85
  %v339 = vunpack.c.l.b16 %v86
  %v340 = vunpack.c.l.b16 %v87
  %v341 = vunpack.c.l.b16 %v88
  %v342 = vunpack.c.l.b16 %v89
  %v343 = vunpack.c.l.b16 %v90
  %v344 = vunpack.c.l.b16 %v91
  %v345 = vunpack.c.l.b16 %v92
  %v346 = vunpack.c.l.b16 %v93
  %v347 = vunpack.c.l.b16 %v94
  %v348 = vunpack.c.l.b16 %v95
  %v349 = vunpack.c.l.b16 %v96
  %v350 = vunpack.c.l.b16 %v97
  %v351 = vunpack.c.l.b16 %v98
  %v352 = vunpack.c.l.b16 %v99
  %v353 = vunpack.c.l.b16 %v100
  %v354 = vunpack.c.l.b16 %v101
  %v355 = vunpack.c.l.b16 %v102
  %v356 = vunpack.c.l.b16 %v103
  %v357 = vunpack.c.l.b16 %v104
  %v358 = vunpack.c.l.b16 %v105
  %v359 = vunpack.c.l.b16 %v106
  %v360 = vunpack.c.l.b16 %v107
  %v361 = vunpack.c.l.b16 %v108
  %v362 = vunpack.c.l.b16 %v109
  %v363 = vunpack.c.l.b16 %v110
  %v364 = vunpack.c.l.b16 %v111
  %v365 = vunpack.c.l.b16 %v112
  %v366 = vunpack.c.l.b16 %v113
  %v367 = vunpack.c.l.b16 %v114
  %v368 = vunpack.c.l.b16 %v115
  %v369 = vunpack.c.l.b16 %v116
  %v370 = vunpack.c.l.b16 %v117
  %v371 = vunpack.c.l.b16 %v118
  %v372 = vunpack.c.l.b16 %v119
  %v373 = vunpack.c.l.b16 %v120
  %v374 = vunpack.c.l.b16 %v121
  %v375 = vunpack.c.l.b16 %v122
  %v376 = vunpack.c.l.b16 %v123
  %v377 = vunpack.c.l.b16 %v124
  %v378 = vunpack.c.l.b16 %v125
  %v379 = vunpack.c.l.b16 %v126
  %v380 = vunpack.c.l.b16 %v127
  %v381 = vunpack.c.l.b16 %v128
  %v382 = vunpack.c.l.b16 %v129
  %v383 = vpack.c.b16 %v272, %v271
  %v384 = vpack.c.b16 %v274, %v273
  %v385 = vpack.c.b16 %v276, %v275
  %v386 = vpack.c.b16 %v278, %v277
  %v387 = vpack.c.b16 %v280, %v279
  %v388 = vpack.c.b16 %v282, %v281
  %v389 = vpack.c.b16 %v284, %v283
  %v390 = vpack.c.b16 %v286, %v285
  %v391 = vpack.c.b16 %v288, %v287
  %v392 = vpack.c.b16 %v290, %v289
  %v393 = vpack.c.b16 %v292, %v291
  %v394 = vpack.c.b16 %v294, %v293
  %v395 = vpack.c.b16 %v296, %v295
  %v396 = vpack.c.b16 %v298, %v297
  %v397 = vpack.c.b16 %v300, %v299
  %v398 = vpack.c.b16 %v302, %v301
  %v399 = vpack.c.b16 %v304, %v303
  %v400 = vpack.c.b16 %v306, %v305
  %v401 = vpack.c.b16 %v308, %v307
  %v402 = vpack.c.b16 %v310, %v309
  %v403 = vpack.c.b16 %v312, %v311
  %v404 = vpack.c.b16 %v314, %v313
  %v405 = vpack.c.b16 %v316, %v315
  %v406 = vpack.c.b16 %v318, %v317
  %v407 = vpack.c.b16 %v320, %v319
  %v408 = vpack.c.b16 %v322, %v321
  %v409 = vpack.c.b16 %v324, %v323
  %v410 = vpack.c.b16 %v326, %v325
  %v411 = vpack.c.b16 %v328, %v327
  %v412 = vpack.c.b16 %v330, %v329
  %v413 = vpack.c.b16 %v332, %v331
  %v414 = vpack.c.b16 %v334, %v333
  %v415 = vpack.c.b16 %v336, %v335
  %v416 = vpack.c.b16 %v338, %v337
  %v417 = vpack.c.b16 %v340, %v339
  %v418 = vpack.c.b16 %v342, %v341
  %v419 = vpack.c.b16 %v344, %v343
  %v420 = vpack.c.b16 %v346, %v345
  %v421 = vpack.c.b16 %v348, %v347
  %v422 = vpack.c.b16 %v350, %v349
  %v423 = vpack.c.b16 %v352, %v351
  %v424 = vpack.c.b16 %v354, %v353
  %v425 = vpack.c.b16 %v356, %v355
  %v426 = vpack.c.b16 %v358, %v357
  %v427 = vpack.c.b16 %v360, %v359
  %v428 = vpack.c.b16 %v362, %v361
  %v429 = vpack.c.b16 %v364, %v363
  %v430 = vpack.c.b16 %v366, %v365
  %v431 = vpack.c.b16 %v368, %v367
  %v432 = vpack.c.b16 %v370, %v369
  %v433 = vpack.c.b16 %v372, %v371
  %v434 = vpack.c.b16 %v374, %v373
  %v435 = vpack.c.b16 %v376, %v375
  %v436 = vpack.c.b16 %v378, %v377
  %v437 = vpack.c.b16 %v380, %v379
  %v438 = vpack.c.b16 %v382, %v381
  %495 = vmatpush.bf16.msra.mxu0 %v390
  %496 = vmatpush.bf16.msra.mxu0 %v389
  %497 = vmatpush.bf16.msra.mxu0 %v388
  %498 = vmatpush.bf16.msra.mxu0 %v387
  %499 = vmatpush.bf16.msra.mxu0 %v386
  %500 = vmatpush.bf16.msra.mxu0 %v385
  %501 = vmatpush.bf16.msra.mxu0 %v384
  %502 = vmatpush.bf16.msra.mxu0 %v383
  %503 = vmatmul.bf16.gmra.mxu0 %v145
  %v504 = vpop.f32.mrf.mxu0
  %v505 = vadd.f32 %v132, %v504
  %v506 = vpop.f32.mrf.mxu0
  %507 = vdwg.mxu0
  %508 = vmatpush.bf16.msra.mxu0 %v398
  %509 = vmatpush.bf16.msra.mxu0 %v397
  %510 = vmatpush.bf16.msra.mxu0 %v396
  %511 = vmatpush.bf16.msra.mxu0 %v395
  %512 = vmatpush.bf16.msra.mxu0 %v394
  %513 = vmatpush.bf16.msra.mxu0 %v393
  %514 = vmatpush.bf16.msra.mxu0 %v392
  %515 = vmatpush.bf16.msra.mxu0 %v391
  %516 = vmatmul.bf16.gmra.mxu0 %v146
  %v517 = vpop.f32.mrf.mxu0
  %v518 = vadd.f32 %v505, %v517
  %v519 = vpop.f32.mrf.mxu0
  %520 = vdwg.mxu0
  %521 = vmatpush.bf16.msra.mxu0 %v406
  %522 = vmatpush.bf16.msra.mxu0 %v405
  %523 = vmatpush.bf16.msra.mxu0 %v404
  %524 = vmatpush.bf16.msra.mxu0 %v403
  %525 = vmatpush.bf16.msra.mxu0 %v402
  %526 = vmatpush.bf16.msra.mxu0 %v401
  %527 = vmatpush.bf16.msra.mxu0 %v400
  %528 = vmatpush.bf16.msra.mxu0 %v399
  %529 = vmatmul.bf16.gmra.mxu0 %v147
  %v530 = vpop.f32.mrf.mxu0
  %v531 = vadd.f32 %v518, %v530
  %v532 = vpop.f32.mrf.mxu0
  %533 = vdwg.mxu0
  %534 = vmatpush.bf16.msra.mxu0 %v414
  %535 = vmatpush.bf16.msra.mxu0 %v413
  %536 = vmatpush.bf16.msra.mxu0 %v412
  %537 = vmatpush.bf16.msra.mxu0 %v411
  %538 = vmatpush.bf16.msra.mxu0 %v410
  %539 = vmatpush.bf16.msra.mxu0 %v409
  %540 = vmatpush.bf16.msra.mxu0 %v408
  %541 = vmatpush.bf16.msra.mxu0 %v407
  %542 = vmatmul.bf16.gmra.mxu0 %v148
  %v543 = vpop.f32.mrf.mxu0
  %v544 = vadd.f32 %v531, %v543
  %v545 = vpop.f32.mrf.mxu0
  %546 = vdwg.mxu0
  %547 = vmatpush.bf16.msra.mxu0 %v422
  %548 = vmatpush.bf16.msra.mxu0 %v421
  %549 = vmatpush.bf16.msra.mxu0 %v420
  %550 = vmatpush.bf16.msra.mxu0 %v419
  %551 = vmatpush.bf16.msra.mxu0 %v418
  %552 = vmatpush.bf16.msra.mxu0 %v417
  %553 = vmatpush.bf16.msra.mxu0 %v416
  %554 = vmatpush.bf16.msra.mxu0 %v415
  %555 = vmatmul.bf16.gmra.mxu0 %v149
  %v556 = vpop.f32.mrf.mxu0
  %v557 = vadd.f32 %v544, %v556
  %v558 = vpop.f32.mrf.mxu0
  %559 = vdwg.mxu0
  %560 = vmatpush.bf16.msra.mxu0 %v430
  %561 = vmatpush.bf16.msra.mxu0 %v429
  %562 = vmatpush.bf16.msra.mxu0 %v428
  %563 = vmatpush.bf16.msra.mxu0 %v427
  %564 = vmatpush.bf16.msra.mxu0 %v426
  %565 = vmatpush.bf16.msra.mxu0 %v425
  %566 = vmatpush.bf16.msra.mxu0 %v424
  %567 = vmatpush.bf16.msra.mxu0 %v423
  %568 = vmatmul.bf16.gmra.mxu0 %v150
  %v569 = vpop.f32.mrf.mxu0
  %v570 = vadd.f32 %v557, %v569
  %v571 = vpop.f32.mrf.mxu0
  %572 = vdwg.mxu0
  %573 = vmatpush.bf16.msra.mxu0 %v438
  %574 = vmatpush.bf16.msra.mxu0 %v437
  %575 = vmatpush.bf16.msra.mxu0 %v436
  %576 = vmatpush.bf16.msra.mxu0 %v435
  %577 = vmatpush.bf16.msra.mxu0 %v434
  %578 = vmatpush.bf16.msra.mxu0 %v433
  %579 = vmatpush.bf16.msra.mxu0 %v432
  %580 = vmatpush.bf16.msra.mxu0 %v431
  %581 = vmatmul.bf16.gmra.mxu0 %v151
  %v582 = vpop.f32.mrf.mxu0
  %v583 = vadd.f32 %v570, %v582
  %v584 = vpop.f32.mrf.mxu0
  %585 = vdwg.mxu0
  %v586 = vmax.f32 %v583, 0.0
  %v587 = vpack.c.bf16 %v586, %v586
  %vm588 = vcmask 257024
  %589 = vst.msk [vmem:[%s3] sm:$0xf] %vm588, %v587
  // Predicated region
  $region14: #{dqn_forward.6} parent=0 // pred_check
    _
  $region15: #{dqn_forward.6} parent=0 // pred_check_branch
    %591 = sbr.rel (0) target = $region17
  $region16: #{dqn_forward.6} parent=0 // pred_region
    _
  $region17: #{dqn_forward.6} parent=0 // pred_fallthru
    _
  // Predicated region
  $region18: #{dqn_forward.6} parent=0 // pred_check
    _
  $region19: #{dqn_forward.6} parent=0 // pred_check_branch
    %593 = sbr.rel (0) target = $region21
  $region20: #{dqn_forward.6} parent=0 // pred_region
    _
  $region21: #{dqn_forward.6} parent=0 // pred_fallthru
    _

</llo_original>
